<compile_context>
chip_gen: v5e
topology: v5e:2x2
jax: 0.10.0
libtpu: 0.0.40
codegen_flags: <defaults>
</compile_context>

<pallas_src>
import jax
import jax.numpy as jnp
from jax.experimental import pallas as pl
from jax.experimental.pallas import tpu as pltpu

EPS = 1e-5  # nn.BatchNorm2d default eps


# ---------------------------------------------------------------------------
# In-kernel helpers
# ---------------------------------------------------------------------------
def _banded_conv3x3(pad_ref, wband_ref, H):
    """3x3 'SAME' conv as 3 MXU matmuls (one per kernel row dy).

    pad_ref  : (H+2, (W+1)*Cin) zero-padded, lane-dense image (VMEM scratch)
    wband_ref: (3, (W+1)*Cin, W*Cout) block-banded weights
    returns  : (H, W*Cout) float32
    """
    acc = jnp.dot(pad_ref[0:H, :], wband_ref[0],
                  preferred_element_type=jnp.float32)
    acc = acc + jnp.dot(pad_ref[1:H + 1, :], wband_ref[1],
                        preferred_element_type=jnp.float32)
    acc = acc + jnp.dot(pad_ref[2:H + 2, :], wband_ref[2],
                        preferred_element_type=jnp.float32)
    return acc


def _emit_conv_outputs(acc, o_ref, mean_ref, m2_ref):
    """Write conv result + per-image per-lane BN partials (mean, centered M2)."""
    o_ref[...] = acc[None]
    m = jnp.mean(acc, axis=0, keepdims=True)                  # (1, W*Cout)
    mean_ref[...] = m[None]
    m2_ref[...] = jnp.sum((acc - m) ** 2, axis=0, keepdims=True)[None]


# ---------------------------------------------------------------------------
# Kernels
# ---------------------------------------------------------------------------
def conv_stats_kernel(x_ref, wband_ref, o_ref, mean_ref, m2_ref, pad_ref):
    """conv1: in-VMEM zero pad -> banded 3x3 conv -> BN1 partial stats."""
    H = x_ref.shape[1]
    wcin = x_ref.shape[2]
    pad_ref[...] = jnp.zeros_like(pad_ref)      # every step: megacore-safe
    pad_ref[1:H + 1, 0:wcin] = x_ref[0]
    acc = _banded_conv3x3(pad_ref, wband_ref, H)
    _emit_conv_outputs(acc, o_ref, mean_ref, m2_ref)


def bn_relu_conv_stats_kernel(c_ref, scale_ref, shift_ref, wband_ref,
                              o_ref, mean_ref, m2_ref, pad_ref):
    """Fused BN1-apply + ReLU + conv2 + BN2 partial stats."""
    H = c_ref.shape[1]
    h = jnp.maximum(c_ref[0] * scale_ref[...] + shift_ref[...], 0.0)
    pad_ref[...] = jnp.zeros_like(pad_ref)
    pad_ref[1:H + 1, 0:h.shape[1]] = h
    acc = _banded_conv3x3(pad_ref, wband_ref, H)
    _emit_conv_outputs(acc, o_ref, mean_ref, m2_ref)


def bn_add_relu_kernel(c_ref, res_ref, scale_ref, shift_ref, o_ref):
    """Fused BN2-apply + identity residual add + ReLU (lane-dense elementwise)."""
    y = c_ref[...] * scale_ref[...] + shift_ref[...] + res_ref[...]
    o_ref[...] = jnp.maximum(y, 0.0)


# ---------------------------------------------------------------------------
# pallas_call wrappers
# ---------------------------------------------------------------------------
def _compiler_params():
    return pltpu.CompilerParams(
        dimension_semantics=("parallel",),     # pipeline + v7x megacore sharding
        vmem_limit_bytes=32 * 1024 * 1024,     # safe on v5e / v6e / v7x
    )


def _conv1_call(x_l, wband):
    N, H, wcin = x_l.shape
    K, wcout = wband.shape[1], wband.shape[2]
    return pl.pallas_call(
        conv_stats_kernel,
        out_shape=(
            jax.ShapeDtypeStruct((N, H, wcout), jnp.float32),
            jax.ShapeDtypeStruct((N, 1, wcout), jnp.float32),
            jax.ShapeDtypeStruct((N, 1, wcout), jnp.float32),
        ),
        grid=(N,),
        in_specs=[
            pl.BlockSpec((1, H, wcin), lambda n: (n, 0, 0)),
            pl.BlockSpec((3, K, wcout), lambda n: (0, 0, 0)),
        ],
        out_specs=(
            pl.BlockSpec((1, H, wcout), lambda n: (n, 0, 0)),
            pl.BlockSpec((1, 1, wcout), lambda n: (n, 0, 0)),
            pl.BlockSpec((1, 1, wcout), lambda n: (n, 0, 0)),
        ),
        scratch_shapes=[pltpu.VMEM((H + 2, K), jnp.float32)],
        compiler_params=_compiler_params(),
    )(x_l, wband)


def _bn_relu_conv2_call(c1, scale_l, shift_l, wband):
    N, H, wc = c1.shape
    K, wcout = wband.shape[1], wband.shape[2]
    return pl.pallas_call(
        bn_relu_conv_stats_kernel,
        out_shape=(
            jax.ShapeDtypeStruct((N, H, wcout), jnp.float32),
            jax.ShapeDtypeStruct((N, 1, wcout), jnp.float32),
            jax.ShapeDtypeStruct((N, 1, wcout), jnp.float32),
        ),
        grid=(N,),
        in_specs=[
            pl.BlockSpec((1, H, wc), lambda n: (n, 0, 0)),
            pl.BlockSpec((1, wc), lambda n: (0, 0)),
            pl.BlockSpec((1, wc), lambda n: (0, 0)),
            pl.BlockSpec((3, K, wcout), lambda n: (0, 0, 0)),
        ],
        out_specs=(
            pl.BlockSpec((1, H, wcout), lambda n: (n, 0, 0)),
            pl.BlockSpec((1, 1, wcout), lambda n: (n, 0, 0)),
            pl.BlockSpec((1, 1, wcout), lambda n: (n, 0, 0)),
        ),
        scratch_shapes=[pltpu.VMEM((H + 2, K), jnp.float32)],
        compiler_params=_compiler_params(),
    )(c1, scale_l, shift_l, wband)


def _bn_add_relu_call(c2, res_l, scale_l, shift_l):
    N, H, wc = c2.shape
    return pl.pallas_call(
        bn_add_relu_kernel,
        out_shape=jax.ShapeDtypeStruct((N, H, wc), jnp.float32),
        grid=(N,),
        in_specs=[
            pl.BlockSpec((1, H, wc), lambda n: (n, 0, 0)),
            pl.BlockSpec((1, H, wc), lambda n: (n, 0, 0)),
            pl.BlockSpec((1, wc), lambda n: (0, 0)),
            pl.BlockSpec((1, wc), lambda n: (0, 0)),
        ],
        out_specs=pl.BlockSpec((1, H, wc), lambda n: (n, 0, 0)),
        compiler_params=_compiler_params(),
    )(c2, res_l, scale_l, shift_l)


# ---------------------------------------------------------------------------
# Host-side (XLA) helpers
# ---------------------------------------------------------------------------
def _make_banded_weight(w, W):
    """Fold 3x3 HWIO weights into 3 block-banded matmul operands (one per dy).

    w: (3, 3, Cin, Cout)  ->  (3, (W+1)*Cin, W*Cout) with
    band[dy, u*Cin+ci, w*Cout+co] = w[dy, u-w+1, ci, co] for 0 <= u-w+1 <= 2.
    """
    dtype = w.dtype
    _, _, cin, cout = w.shape
    bands = []
    for dy in range(3):
        sec = jnp.zeros(((W + 1) * cin, W * cout), dtype)
        for dx in range(3):
            sec = sec + jnp.kron(jnp.eye(W + 1, W, k=1 - dx, dtype=dtype),
                                 w[dy, dx])
        bands.append(sec)
    return jnp.stack(bands, axis=0)


def _bn_scale_shift(mean_l, m2_l, gamma, beta, H, W, C):
    """Combine per-image per-lane (mean, M2) partials into global BN affine.

    Chan's parallel-variance combine over N*W groups of H samples each —
    centered (two-pass quality) variance. Returns (1, W*C) per-lane vectors.
    """
    N = mean_l.shape[0]
    mg = mean_l.reshape(N, W, C)
    qg = m2_l.reshape(N, W, C)
    mean = jnp.mean(mg, axis=(0, 1))                                    # (C,)
    m2 = jnp.sum(qg, axis=(0, 1)) + H * jnp.sum((mg - mean) ** 2, axis=(0, 1))
    var = m2 / (N * H * W)   # biased, as nn.BatchNorm2d normalization uses
    scale = gamma * jax.lax.rsqrt(var + EPS)
    shift = beta - mean * scale
    return jnp.tile(scale, W)[None, :], jnp.tile(shift, W)[None, :]


@jax.jit
def residual_block(x, w1, g1, b1, w2, g2, b2):
    """x: (N,H,W,C) NHWC; w*: (3,3,C,C) HWIO; g*/b*: (C,). Train-mode forward."""
    N, H, W, C = x.shape

    wband1 = _make_banded_weight(w1, W)
    wband2 = _make_banded_weight(w2, W)

    x_l = x.reshape(N, H, W * C)                 # lane-dense activation layout

    # conv1 (+ per-image BN1 partial stats)
    c1, m1, q1 = _conv1_call(x_l, wband1)
    scale1, shift1 = _bn_scale_shift(m1, q1, g1, b1, H, W, C)

    # bn1 + relu + conv2 (+ per-image BN2 partial stats), fused
    c2, m2, q2 = _bn_relu_conv2_call(c1, scale1, shift1, wband2)
    scale2, shift2 = _bn_scale_shift(m2, q2, g2, b2, H, W, C)

    # bn2 + identity add + relu
    out_l = _bn_add_relu_call(c2, x_l, scale2, shift2)
    return out_l.reshape(N, H, W, C)


# ---------------------------------------------------------------------------
# Pure-JAX reference (for a self-check)
# ---------------------------------------------------------------------------
def _reference(x, w1, g1, b1, w2, g2, b2):
    def conv(z, w):
        return jax.lax.conv_general_dilated(
            z, w, window_strides=(1, 1), padding="SAME",
            dimension_numbers=("NHWC", "HWIO", "NHWC"))

    def bn(z, g, b):
        m = jnp.mean(z, axis=(0, 1, 2))
        v = jnp.mean((z - m) ** 2, axis=(0, 1, 2))
        return (z - m) * jax.lax.rsqrt(v + EPS) * g + b

    h = jax.nn.relu(bn(conv(x, w1), g1, b1))
    return jax.nn.relu(bn(conv(h, w2), g2, b2) + x)


if __name__ == "__main__":
    # ResidualBlock(in_channels=8, out_channels=8, stride=1); W*C = 128 lanes.
    N, C, Hs, Ws = 2, 8, 16, 16

    key = jax.random.PRNGKey(0)
    kx, kw1, kw2 = jax.random.split(key, 3)

    x = jax.random.normal(kx, (N, Hs, Ws, C), dtype=jnp.float32)
    w1 = 0.1 * jax.random.normal(kw1, (3, 3, C, C), dtype=jnp.float32)
    w2 = 0.1 * jax.random.normal(kw2, (3, 3, C, C), dtype=jnp.float32)
    g1 = jnp.ones((C,), jnp.float32)
    b1 = jnp.zeros((C,), jnp.float32)
    g2 = jnp.ones((C,), jnp.float32)
    b2 = jnp.zeros((C,), jnp.float32)

    out = residual_block(x, w1, g1, b1, w2, g2, b2)
    jax.block_until_ready(out)

    assert out.shape == (N, Hs, Ws, C)
    assert bool(jnp.all(out >= 0.0))          # final ReLU
    ref = _reference(x, w1, g1, b1, w2, g2, b2)
    assert bool(jnp.allclose(out, ref, atol=3e-2, rtol=3e-2)), \
        float(jnp.max(jnp.abs(out - ref)))
    print("KERNEL_OK")
</pallas_src>

<mosaic_0001>
module attributes {stable_mosaic.version = 11 : i64} {
  func.func @conv_stats_kernel(%arg0: i32, %arg1: memref<1x16x128xf32, #tpu.memory_space<vmem>>, %arg2: memref<3x136x128xf32, #tpu.memory_space<vmem>>, %arg3: memref<1x16x128xf32, #tpu.memory_space<vmem>>, %arg4: memref<1x1x128xf32, #tpu.memory_space<vmem>>, %arg5: memref<1x1x128xf32, #tpu.memory_space<vmem>>, %arg6: memref<18x136xf32, #tpu.memory_space<vmem>>) attributes {dimension_semantics = [#tpu.dimension_semantics<parallel>], iteration_bounds = array<i64: 2>, scalar_prefetch = 0 : i64, scratch_operands = 1 : i64, tpu.core_type = #tpu.core_type<tc>, window_params = [{transform_indices = @transform_0, window_bounds = array<i64: 1, 16, 128>}, {pipeline_mode = #tpu.pipeline_mode<synchronous>, transform_indices = @transform_1, window_bounds = array<i64: 3, 136, 128>}, {transform_indices = @transform_2, window_bounds = array<i64: 1, 16, 128>}, {transform_indices = @transform_3, window_bounds = array<i64: 1, 1, 128>}, {transform_indices = @transform_4, window_bounds = array<i64: 1, 1, 128>}]} {
    %cst = arith.constant 0.000000e+00 : f32
    %0 = vector.broadcast %cst : f32 to vector<18x136xf32>
    %c0 = arith.constant 0 : index
    %c0_0 = arith.constant 0 : index
    %1 = vector.load %arg6[%c0, %c0_0] : memref<18x136xf32, #tpu.memory_space<vmem>>, vector<18x136xf32>
    tpu.vector_store %arg6[%c0, %c0_0], %0 {strides = array<i32>} : memref<18x136xf32, #tpu.memory_space<vmem>>, vector<18x136xf32>,
    %c0_1 = arith.constant 0 : index
    %c0_2 = arith.constant 0 : index
    %c0_3 = arith.constant 0 : index
    %2 = vector.load %arg1[%c0_1, %c0_2, %c0_3] : memref<1x16x128xf32, #tpu.memory_space<vmem>>, vector<1x16x128xf32>
    %3 = vector.shape_cast %2 : vector<1x16x128xf32> to vector<16x128xf32>
    %c1 = arith.constant 1 : index
    %c0_4 = arith.constant 0 : index
    %4 = vector.load %arg6[%c1, %c0_4] : memref<18x136xf32, #tpu.memory_space<vmem>>, vector<16x128xf32>
    tpu.vector_store %arg6[%c1, %c0_4], %3 {strides = array<i32>} : memref<18x136xf32, #tpu.memory_space<vmem>>, vector<16x128xf32>,
    %c0_5 = arith.constant 0 : index
    %c0_6 = arith.constant 0 : index
    %5 = vector.load %arg6[%c0_5, %c0_6] : memref<18x136xf32, #tpu.memory_space<vmem>>, vector<16x136xf32>
    %c0_7 = arith.constant 0 : index
    %c0_8 = arith.constant 0 : index
    %c0_9 = arith.constant 0 : index
    %6 = vector.load %arg2[%c0_7, %c0_8, %c0_9] : memref<3x136x128xf32, #tpu.memory_space<vmem>>, vector<1x136x128xf32>
    %7 = vector.shape_cast %6 : vector<1x136x128xf32> to vector<136x128xf32>
    %cst_10 = arith.constant dense<0.000000e+00> : vector<16x128xf32>
    %8 = tpu.matmul %5, %7, %cst_10 {dimension_numbers = #tpu.dot_dimension_numbers<[1], [0], [0], [1], [0, 0, 1, 1], [], []>} : vector<16x136xf32>, vector<136x128xf32>, vector<16x128xf32> -> vector<16x128xf32>
    %c1_11 = arith.constant 1 : index
    %c0_12 = arith.constant 0 : index
    %9 = vector.load %arg6[%c1_11, %c0_12] : memref<18x136xf32, #tpu.memory_space<vmem>>, vector<16x136xf32>
    %c1_13 = arith.constant 1 : index
    %c0_14 = arith.constant 0 : index
    %c0_15 = arith.constant 0 : index
    %10 = vector.load %arg2[%c1_13, %c0_14, %c0_15] : memref<3x136x128xf32, #tpu.memory_space<vmem>>, vector<1x136x128xf32>
    %11 = vector.shape_cast %10 : vector<1x136x128xf32> to vector<136x128xf32>
    %cst_16 = arith.constant dense<0.000000e+00> : vector<16x128xf32>
    %12 = tpu.matmul %9, %11, %cst_16 {dimension_numbers = #tpu.dot_dimension_numbers<[1], [0], [0], [1], [0, 0, 1, 1], [], []>} : vector<16x136xf32>, vector<136x128xf32>, vector<16x128xf32> -> vector<16x128xf32>
    %13 = arith.addf %8, %12 : vector<16x128xf32>
    %c2 = arith.constant 2 : index
    %c0_17 = arith.constant 0 : index
    %14 = vector.load %arg6[%c2, %c0_17] : memref<18x136xf32, #tpu.memory_space<vmem>>, vector<16x136xf32>
    %c2_18 = arith.constant 2 : index
    %c0_19 = arith.constant 0 : index
    %c0_20 = arith.constant 0 : index
    %15 = vector.load %arg2[%c2_18, %c0_19, %c0_20] : memref<3x136x128xf32, #tpu.memory_space<vmem>>, vector<1x136x128xf32>
    %16 = vector.shape_cast %15 : vector<1x136x128xf32> to vector<136x128xf32>
    %cst_21 = arith.constant dense<0.000000e+00> : vector<16x128xf32>
    %17 = tpu.matmul %14, %16, %cst_21 {dimension_numbers = #tpu.dot_dimension_numbers<[1], [0], [0], [1], [0, 0, 1, 1], [], []>} : vector<16x136xf32>, vector<136x128xf32>, vector<16x128xf32> -> vector<16x128xf32>
    %18 = arith.addf %13, %17 : vector<16x128xf32>
    %19 = vector.shape_cast %18 : vector<16x128xf32> to vector<1x16x128xf32>
    %c0_22 = arith.constant 0 : index
    %c0_23 = arith.constant 0 : index
    %c0_24 = arith.constant 0 : index
    %20 = vector.load %arg3[%c0_22, %c0_23, %c0_24] : memref<1x16x128xf32, #tpu.memory_space<vmem>>, vector<1x16x128xf32>
    tpu.vector_store %arg3[%c0_22, %c0_23, %c0_24], %19 {strides = array<i32>} : memref<1x16x128xf32, #tpu.memory_space<vmem>>, vector<1x16x128xf32>,
    %cst_25 = arith.constant dense<0.000000e+00> : vector<128xf32>
    %21 = vector.multi_reduction <add>, %18, %cst_25 [0] : vector<16x128xf32> to vector<128xf32>
    %22 = vector.shape_cast %21 : vector<128xf32> to vector<1x128xf32>
    %cst_26 = arith.constant 1.600000e+01 : f32
    %23 = vector.broadcast %cst_26 : f32 to vector<1x128xf32>
    %24 = arith.divf %22, %23 : vector<1x128xf32>
    %25 = vector.shape_cast %24 : vector<1x128xf32> to vector<1x1x128xf32>
    %c0_27 = arith.constant 0 : index
    %c0_28 = arith.constant 0 : index
    %c0_29 = arith.constant 0 : index
    %26 = vector.load %arg4[%c0_27, %c0_28, %c0_29] : memref<1x1x128xf32, #tpu.memory_space<vmem>>, vector<1x1x128xf32>
    tpu.vector_store %arg4[%c0_27, %c0_28, %c0_29], %25 {strides = array<i32>} : memref<1x1x128xf32, #tpu.memory_space<vmem>>, vector<1x1x128xf32>,
    %27 = vector.broadcast %24 : vector<1x128xf32> to vector<16x128xf32>
    %28 = arith.subf %18, %27 : vector<16x128xf32>
    %29 = arith.mulf %28, %28 : vector<16x128xf32>
    %cst_30 = arith.constant dense<0.000000e+00> : vector<128xf32>
    %30 = vector.multi_reduction <add>, %29, %cst_30 [0] : vector<16x128xf32> to vector<128xf32>
    %31 = vector.shape_cast %30 : vector<128xf32> to vector<1x128xf32>
    %32 = vector.shape_cast %31 : vector<1x128xf32> to vector<1x1x128xf32>
    %c0_31 = arith.constant 0 : index
    %c0_32 = arith.constant 0 : index
    %c0_33 = arith.constant 0 : index
    %33 = vector.load %arg5[%c0_31, %c0_32, %c0_33] : memref<1x1x128xf32, #tpu.memory_space<vmem>>, vector<1x1x128xf32>
    tpu.vector_store %arg5[%c0_31, %c0_32, %c0_33], %32 {strides = array<i32>} : memref<1x1x128xf32, #tpu.memory_space<vmem>>, vector<1x1x128xf32>,
    return
  }
  func.func @transform_0(%arg0: i32) -> (i32, i32, i32) {
    %c0_i32 = arith.constant 0 : i32
    %c0_i32_0 = arith.constant 0 : i32
    %c0_i32_1 = arith.constant 0 : i32
    return %arg0, %c0_i32, %c0_i32_0 : i32, i32, i32
  }
  func.func @transform_1(%arg0: i32) -> (i32, i32, i32) {
    %c0_i32 = arith.constant 0 : i32
    %c0_i32_0 = arith.constant 0 : i32
    %c0_i32_1 = arith.constant 0 : i32
    %c0_i32_2 = arith.constant 0 : i32
    return %c0_i32, %c0_i32_0, %c0_i32_1 : i32, i32, i32
  }
  func.func @transform_2(%arg0: i32) -> (i32, i32, i32) {
    %c0_i32 = arith.constant 0 : i32
    %c0_i32_0 = arith.constant 0 : i32
    %c0_i32_1 = arith.constant 0 : i32
    return %arg0, %c0_i32, %c0_i32_0 : i32, i32, i32
  }
  func.func @transform_3(%arg0: i32) -> (i32, i32, i32) {
    %c0_i32 = arith.constant 0 : i32
    %c0_i32_0 = arith.constant 0 : i32
    %c0_i32_1 = arith.constant 0 : i32
    return %arg0, %c0_i32, %c0_i32_0 : i32, i32, i32
  }
  func.func @transform_4(%arg0: i32) -> (i32, i32, i32) {
    %c0_i32 = arith.constant 0 : i32
    %c0_i32_0 = arith.constant 0 : i32
    %c0_i32_1 = arith.constant 0 : i32
    return %arg0, %c0_i32, %c0_i32_0 : i32, i32, i32
  }
}

module attributes {stable_mosaic.version = 11 : i64} {
  func.func @bn_add_relu_kernel(%arg0: i32, %arg1: memref<1x16x128xf32, #tpu.memory_space<vmem>>, %arg2: memref<1x16x128xf32, #tpu.memory_space<vmem>>, %arg3: memref<1x128xf32, #tpu.memory_space<vmem>>, %arg4: memref<1x128xf32, #tpu.memory_space<vmem>>, %arg5: memref<1x16x128xf32, #tpu.memory_space<vmem>>) attributes {dimension_semantics = [#tpu.dimension_semantics<parallel>], iteration_bounds = array<i64: 2>, scalar_prefetch = 0 : i64, scratch_operands = 0 : i64, tpu.core_type = #tpu.core_type<tc>, window_params = [{transform_indices = @transform_0, window_bounds = array<i64: 1, 16, 128>}, {transform_indices = @transform_1, window_bounds = array<i64: 1, 16, 128>}, {pipeline_mode = #tpu.pipeline_mode<synchronous>, transform_indices = @transform_2, window_bounds = array<i64: 1, 128>}, {pipeline_mode = #tpu.pipeline_mode<synchronous>, transform_indices = @transform_3, window_bounds = array<i64: 1, 128>}, {transform_indices = @transform_4, window_bounds = array<i64: 1, 16, 128>}]} {
    %c0 = arith.constant 0 : index
    %c0_0 = arith.constant 0 : index
    %c0_1 = arith.constant 0 : index
    %0 = vector.load %arg1[%c0, %c0_0, %c0_1] : memref<1x16x128xf32, #tpu.memory_space<vmem>>, vector<1x16x128xf32>
    %c0_2 = arith.constant 0 : index
    %c0_3 = arith.constant 0 : index
    %1 = vector.load %arg3[%c0_2, %c0_3] : memref<1x128xf32, #tpu.memory_space<vmem>>, vector<1x128xf32>
    %2 = vector.shape_cast %1 : vector<1x128xf32> to vector<1x1x128xf32>
    %3 = vector.broadcast %2 : vector<1x1x128xf32> to vector<1x16x128xf32>
    %4 = arith.mulf %0, %3 : vector<1x16x128xf32>
    %c0_4 = arith.constant 0 : index
    %c0_5 = arith.constant 0 : index
    %5 = vector.load %arg4[%c0_4, %c0_5] : memref<1x128xf32, #tpu.memory_space<vmem>>, vector<1x128xf32>
    %6 = vector.shape_cast %5 : vector<1x128xf32> to vector<1x1x128xf32>
    %7 = vector.broadcast %6 : vector<1x1x128xf32> to vector<1x16x128xf32>
    %8 = arith.addf %4, %7 : vector<1x16x128xf32>
    %c0_6 = arith.constant 0 : index
    %c0_7 = arith.constant 0 : index
    %c0_8 = arith.constant 0 : index
    %9 = vector.load %arg2[%c0_6, %c0_7, %c0_8] : memref<1x16x128xf32, #tpu.memory_space<vmem>>, vector<1x16x128xf32>
    %10 = arith.addf %8, %9 : vector<1x16x128xf32>
    %cst = arith.constant 0.000000e+00 : f32
    %11 = vector.broadcast %cst : f32 to vector<1x16x128xf32>
    %12 = arith.maximumf %10, %11 : vector<1x16x128xf32>
    %c0_9 = arith.constant 0 : index
    %c0_10 = arith.constant 0 : index
    %c0_11 = arith.constant 0 : index
    %13 = vector.load %arg5[%c0_9, %c0_10, %c0_11] : memref<1x16x128xf32, #tpu.memory_space<vmem>>, vector<1x16x128xf32>
    tpu.vector_store %arg5[%c0_9, %c0_10, %c0_11], %12 {strides = array<i32>} : memref<1x16x128xf32, #tpu.memory_space<vmem>>, vector<1x16x128xf32>,
    return
  }
  func.func @transform_0(%arg0: i32) -> (i32, i32, i32) {
    %c0_i32 = arith.constant 0 : i32
    %c0_i32_0 = arith.constant 0 : i32
    %c0_i32_1 = arith.constant 0 : i32
    return %arg0, %c0_i32, %c0_i32_0 : i32, i32, i32
  }
  func.func @transform_1(%arg0: i32) -> (i32, i32, i32) {
    %c0_i32 = arith.constant 0 : i32
    %c0_i32_0 = arith.constant 0 : i32
    %c0_i32_1 = arith.constant 0 : i32
    return %arg0, %c0_i32, %c0_i32_0 : i32, i32, i32
  }
  func.func @transform_2(%arg0: i32) -> (i32, i32) {
    %c0_i32 = arith.constant 0 : i32
    %c0_i32_0 = arith.constant 0 : i32
    %c0_i32_1 = arith.constant 0 : i32
    return %c0_i32, %c0_i32_0 : i32, i32
  }
  func.func @transform_3(%arg0: i32) -> (i32, i32) {
    %c0_i32 = arith.constant 0 : i32
    %c0_i32_0 = arith.constant 0 : i32
    %c0_i32_1 = arith.constant 0 : i32
    return %c0_i32, %c0_i32_0 : i32, i32
  }
  func.func @transform_4(%arg0: i32) -> (i32, i32, i32) {
    %c0_i32 = arith.constant 0 : i32
    %c0_i32_0 = arith.constant 0 : i32
    %c0_i32_1 = arith.constant 0 : i32
    return %arg0, %c0_i32, %c0_i32_0 : i32, i32, i32
  }
}

module attributes {stable_mosaic.version = 11 : i64} {
  func.func @bn_relu_conv_stats_kernel(%arg0: i32, %arg1: memref<1x16x128xf32, #tpu.memory_space<vmem>>, %arg2: memref<1x128xf32, #tpu.memory_space<vmem>>, %arg3: memref<1x128xf32, #tpu.memory_space<vmem>>, %arg4: memref<3x136x128xf32, #tpu.memory_space<vmem>>, %arg5: memref<1x16x128xf32, #tpu.memory_space<vmem>>, %arg6: memref<1x1x128xf32, #tpu.memory_space<vmem>>, %arg7: memref<1x1x128xf32, #tpu.memory_space<vmem>>, %arg8: memref<18x136xf32, #tpu.memory_space<vmem>>) attributes {dimension_semantics = [#tpu.dimension_semantics<parallel>], iteration_bounds = array<i64: 2>, scalar_prefetch = 0 : i64, scratch_operands = 1 : i64, tpu.core_type = #tpu.core_type<tc>, window_params = [{transform_indices = @transform_0, window_bounds = array<i64: 1, 16, 128>}, {pipeline_mode = #tpu.pipeline_mode<synchronous>, transform_indices = @transform_1, window_bounds = array<i64: 1, 128>}, {pipeline_mode = #tpu.pipeline_mode<synchronous>, transform_indices = @transform_2, window_bounds = array<i64: 1, 128>}, {pipeline_mode = #tpu.pipeline_mode<synchronous>, transform_indices = @transform_3, window_bounds = array<i64: 3, 136, 128>}, {transform_indices = @transform_4, window_bounds = array<i64: 1, 16, 128>}, {transform_indices = @transform_5, window_bounds = array<i64: 1, 1, 128>}, {transform_indices = @transform_6, window_bounds = array<i64: 1, 1, 128>}]} {
    %c0 = arith.constant 0 : index
    %c0_0 = arith.constant 0 : index
    %c0_1 = arith.constant 0 : index
    %0 = vector.load %arg1[%c0, %c0_0, %c0_1] : memref<1x16x128xf32, #tpu.memory_space<vmem>>, vector<1x16x128xf32>
    %1 = vector.shape_cast %0 : vector<1x16x128xf32> to vector<16x128xf32>
    %c0_2 = arith.constant 0 : index
    %c0_3 = arith.constant 0 : index
    %2 = vector.load %arg2[%c0_2, %c0_3] : memref<1x128xf32, #tpu.memory_space<vmem>>, vector<1x128xf32>
    %3 = vector.broadcast %2 : vector<1x128xf32> to vector<16x128xf32>
    %4 = arith.mulf %1, %3 : vector<16x128xf32>
    %c0_4 = arith.constant 0 : index
    %c0_5 = arith.constant 0 : index
    %5 = vector.load %arg3[%c0_4, %c0_5] : memref<1x128xf32, #tpu.memory_space<vmem>>, vector<1x128xf32>
    %6 = vector.broadcast %5 : vector<1x128xf32> to vector<16x128xf32>
    %7 = arith.addf %4, %6 : vector<16x128xf32>
    %cst = arith.constant 0.000000e+00 : f32
    %8 = vector.broadcast %cst : f32 to vector<16x128xf32>
    %9 = arith.maximumf %7, %8 : vector<16x128xf32>
    %cst_6 = arith.constant 0.000000e+00 : f32
    %10 = vector.broadcast %cst_6 : f32 to vector<18x136xf32>
    %c0_7 = arith.constant 0 : index
    %c0_8 = arith.constant 0 : index
    %11 = vector.load %arg8[%c0_7, %c0_8] : memref<18x136xf32, #tpu.memory_space<vmem>>, vector<18x136xf32>
    tpu.vector_store %arg8[%c0_7, %c0_8], %10 {strides = array<i32>} : memref<18x136xf32, #tpu.memory_space<vmem>>, vector<18x136xf32>,
    %c1 = arith.constant 1 : index
    %c0_9 = arith.constant 0 : index
    %12 = vector.load %arg8[%c1, %c0_9] : memref<18x136xf32, #tpu.memory_space<vmem>>, vector<16x128xf32>
    tpu.vector_store %arg8[%c1, %c0_9], %9 {strides = array<i32>} : memref<18x136xf32, #tpu.memory_space<vmem>>, vector<16x128xf32>,
    %c0_10 = arith.constant 0 : index
    %c0_11 = arith.constant 0 : index
    %13 = vector.load %arg8[%c0_10, %c0_11] : memref<18x136xf32, #tpu.memory_space<vmem>>, vector<16x136xf32>
    %c0_12 = arith.constant 0 : index
    %c0_13 = arith.constant 0 : index
    %c0_14 = arith.constant 0 : index
    %14 = vector.load %arg4[%c0_12, %c0_13, %c0_14] : memref<3x136x128xf32, #tpu.memory_space<vmem>>, vector<1x136x128xf32>
    %15 = vector.shape_cast %14 : vector<1x136x128xf32> to vector<136x128xf32>
    %cst_15 = arith.constant dense<0.000000e+00> : vector<16x128xf32>
    %16 = tpu.matmul %13, %15, %cst_15 {dimension_numbers = #tpu.dot_dimension_numbers<[1], [0], [0], [1], [0, 0, 1, 1], [], []>} : vector<16x136xf32>, vector<136x128xf32>, vector<16x128xf32> -> vector<16x128xf32>
    %c1_16 = arith.constant 1 : index
    %c0_17 = arith.constant 0 : index
    %17 = vector.load %arg8[%c1_16, %c0_17] : memref<18x136xf32, #tpu.memory_space<vmem>>, vector<16x136xf32>
    %c1_18 = arith.constant 1 : index
    %c0_19 = arith.constant 0 : index
    %c0_20 = arith.constant 0 : index
    %18 = vector.load %arg4[%c1_18, %c0_19, %c0_20] : memref<3x136x128xf32, #tpu.memory_space<vmem>>, vector<1x136x128xf32>
    %19 = vector.shape_cast %18 : vector<1x136x128xf32> to vector<136x128xf32>
    %cst_21 = arith.constant dense<0.000000e+00> : vector<16x128xf32>
    %20 = tpu.matmul %17, %19, %cst_21 {dimension_numbers = #tpu.dot_dimension_numbers<[1], [0], [0], [1], [0, 0, 1, 1], [], []>} : vector<16x136xf32>, vector<136x128xf32>, vector<16x128xf32> -> vector<16x128xf32>
    %21 = arith.addf %16, %20 : vector<16x128xf32>
    %c2 = arith.constant 2 : index
    %c0_22 = arith.constant 0 : index
    %22 = vector.load %arg8[%c2, %c0_22] : memref<18x136xf32, #tpu.memory_space<vmem>>, vector<16x136xf32>
    %c2_23 = arith.constant 2 : index
    %c0_24 = arith.constant 0 : index
    %c0_25 = arith.constant 0 : index
    %23 = vector.load %arg4[%c2_23, %c0_24, %c0_25] : memref<3x136x128xf32, #tpu.memory_space<vmem>>, vector<1x136x128xf32>
    %24 = vector.shape_cast %23 : vector<1x136x128xf32> to vector<136x128xf32>
    %cst_26 = arith.constant dense<0.000000e+00> : vector<16x128xf32>
    %25 = tpu.matmul %22, %24, %cst_26 {dimension_numbers = #tpu.dot_dimension_numbers<[1], [0], [0], [1], [0, 0, 1, 1], [], []>} : vector<16x136xf32>, vector<136x128xf32>, vector<16x128xf32> -> vector<16x128xf32>
    %26 = arith.addf %21, %25 : vector<16x128xf32>
    %27 = vector.shape_cast %26 : vector<16x128xf32> to vector<1x16x128xf32>
    %c0_27 = arith.constant 0 : index
    %c0_28 = arith.constant 0 : index
    %c0_29 = arith.constant 0 : index
    %28 = vector.load %arg5[%c0_27, %c0_28, %c0_29] : memref<1x16x128xf32, #tpu.memory_space<vmem>>, vector<1x16x128xf32>
    tpu.vector_store %arg5[%c0_27, %c0_28, %c0_29], %27 {strides = array<i32>} : memref<1x16x128xf32, #tpu.memory_space<vmem>>, vector<1x16x128xf32>,
    %cst_30 = arith.constant dense<0.000000e+00> : vector<128xf32>
    %29 = vector.multi_reduction <add>, %26, %cst_30 [0] : vector<16x128xf32> to vector<128xf32>
    %30 = vector.shape_cast %29 : vector<128xf32> to vector<1x128xf32>
    %cst_31 = arith.constant 1.600000e+01 : f32
    %31 = vector.broadcast %cst_31 : f32 to vector<1x128xf32>
    %32 = arith.divf %30, %31 : vector<1x128xf32>
    %33 = vector.shape_cast %32 : vector<1x128xf32> to vector<1x1x128xf32>
    %c0_32 = arith.constant 0 : index
    %c0_33 = arith.constant 0 : index
    %c0_34 = arith.constant 0 : index
    %34 = vector.load %arg6[%c0_32, %c0_33, %c0_34] : memref<1x1x128xf32, #tpu.memory_space<vmem>>, vector<1x1x128xf32>
    tpu.vector_store %arg6[%c0_32, %c0_33, %c0_34], %33 {strides = array<i32>} : memref<1x1x128xf32, #tpu.memory_space<vmem>>, vector<1x1x128xf32>,
    %35 = vector.broadcast %32 : vector<1x128xf32> to vector<16x128xf32>
    %36 = arith.subf %26, %35 : vector<16x128xf32>
    %37 = arith.mulf %36, %36 : vector<16x128xf32>
    %cst_35 = arith.constant dense<0.000000e+00> : vector<128xf32>
    %38 = vector.multi_reduction <add>, %37, %cst_35 [0] : vector<16x128xf32> to vector<128xf32>
    %39 = vector.shape_cast %38 : vector<128xf32> to vector<1x128xf32>
    %40 = vector.shape_cast %39 : vector<1x128xf32> to vector<1x1x128xf32>
    %c0_36 = arith.constant 0 : index
    %c0_37 = arith.constant 0 : index
    %c0_38 = arith.constant 0 : index
    %41 = vector.load %arg7[%c0_36, %c0_37, %c0_38] : memref<1x1x128xf32, #tpu.memory_space<vmem>>, vector<1x1x128xf32>
    tpu.vector_store %arg7[%c0_36, %c0_37, %c0_38], %40 {strides = array<i32>} : memref<1x1x128xf32, #tpu.memory_space<vmem>>, vector<1x1x128xf32>,
    return
  }
  func.func @transform_0(%arg0: i32) -> (i32, i32, i32) {
    %c0_i32 = arith.constant 0 : i32
    %c0_i32_0 = arith.constant 0 : i32
    %c0_i32_1 = arith.constant 0 : i32
    return %arg0, %c0_i32, %c0_i32_0 : i32, i32, i32
  }
  func.func @transform_1(%arg0: i32) -> (i32, i32) {
    %c0_i32 = arith.constant 0 : i32
    %c0_i32_0 = arith.constant 0 : i32
    %c0_i32_1 = arith.constant 0 : i32
    return %c0_i32, %c0_i32_0 : i32, i32
  }
  func.func @transform_2(%arg0: i32) -> (i32, i32) {
    %c0_i32 = arith.constant 0 : i32
    %c0_i32_0 = arith.constant 0 : i32
    %c0_i32_1 = arith.constant 0 : i32
    return %c0_i32, %c0_i32_0 : i32, i32
  }
  func.func @transform_3(%arg0: i32) -> (i32, i32, i32) {
    %c0_i32 = arith.constant 0 : i32
    %c0_i32_0 = arith.constant 0 : i32
    %c0_i32_1 = arith.constant 0 : i32
    %c0_i32_2 = arith.constant 0 : i32
    return %c0_i32, %c0_i32_0, %c0_i32_1 : i32, i32, i32
  }
  func.func @transform_4(%arg0: i32) -> (i32, i32, i32) {
    %c0_i32 = arith.constant 0 : i32
    %c0_i32_0 = arith.constant 0 : i32
    %c0_i32_1 = arith.constant 0 : i32
    return %arg0, %c0_i32, %c0_i32_0 : i32, i32, i32
  }
  func.func @transform_5(%arg0: i32) -> (i32, i32, i32) {
    %c0_i32 = arith.constant 0 : i32
    %c0_i32_0 = arith.constant 0 : i32
    %c0_i32_1 = arith.constant 0 : i32
    return %arg0, %c0_i32, %c0_i32_0 : i32, i32, i32
  }
  func.func @transform_6(%arg0: i32) -> (i32, i32, i32) {
    %c0_i32 = arith.constant 0 : i32
    %c0_i32_0 = arith.constant 0 : i32
    %c0_i32_1 = arith.constant 0 : i32
    return %arg0, %c0_i32, %c0_i32_0 : i32, i32, i32
  }
}

</mosaic_0001>

<llo_original>
// kernel: tile.24
$region0: #{tile.24}
  %s0 = inlined_call_operand.vmem [shape: f32[16,8], index: 0, kind: input, shape index: {}]
  %s1 = inlined_call_operand.vmem [shape: f32[1,128], index: 1, kind: output, shape index: {}]
  $region1: #{tile.24} parent=0
    #allocation0 [shape = 'u8[4096]{0}', space=vmem, size = 0x1000, scoped, tag = 'scoped mem for output reshape']
    %v2 = vld [vmem:[%s0] sm:$0x1]
    %vm3 = vcmask 64512
    %4 = vst.msk [vmem:[#allocation0] sm:$0x1] %vm3, %v2
    %s5 = scalar_lea.vmem %s0, 15
    %v6 = vld [vmem:[%s5] sm:$0x1]
    %7 = vrot.lane.b32.xlu0 %v6, 120
    %v8 = vpop.permute.xlu0 %7
    %vm9 = vcmask 1048512
    %10 = vst.msk [vmem:[#allocation0] sm:$0x1] %vm9, %v8
    %s11 = scalar_lea.vmem %s0, 14
    %v12 = vld [vmem:[%s11] sm:$0x1]
    %13 = vrot.lane.b32.xlu0 %v12, 112
    %v14 = vpop.permute.xlu0 %13
    %vm15 = vcmask 982912
    %16 = vst.msk [vmem:[#allocation0] sm:$0x1] %vm15, %v14
    %s17 = scalar_lea.vmem %s0, 13
    %v18 = vld [vmem:[%s17] sm:$0x1]
    %19 = vrot.lane.b32.xlu0 %v18, 104
    %v20 = vpop.permute.xlu0 %19
    %vm21 = vcmask 917312
    %22 = vst.msk [vmem:[#allocation0] sm:$0x1] %vm21, %v20
    %s23 = scalar_lea.vmem %s0, 12
    %v24 = vld [vmem:[%s23] sm:$0x1]
    %25 = vrot.lane.b32.xlu0 %v24, 96
    %v26 = vpop.permute.xlu0 %25
    %vm27 = vcmask 851712
    %28 = vst.msk [vmem:[#allocation0] sm:$0x1] %vm27, %v26
    %s29 = scalar_lea.vmem %s0, 11
    %v30 = vld [vmem:[%s29] sm:$0x1]
    %31 = vrot.lane.b32.xlu0 %v30, 88
    %v32 = vpop.permute.xlu0 %31
    %vm33 = vcmask 786112
    %34 = vst.msk [vmem:[#allocation0] sm:$0x1] %vm33, %v32
    %s35 = scalar_lea.vmem %s0, 10
    %v36 = vld [vmem:[%s35] sm:$0x1]
    %37 = vrot.lane.b32.xlu0 %v36, 80
    %v38 = vpop.permute.xlu0 %37
    %vm39 = vcmask 720512
    %40 = vst.msk [vmem:[#allocation0] sm:$0x1] %vm39, %v38
    %s41 = scalar_lea.vmem %s0, 9
    %v42 = vld [vmem:[%s41] sm:$0x1]
    %43 = vrot.lane.b32.xlu0 %v42, 72
    %v44 = vpop.permute.xlu0 %43
    %vm45 = vcmask 654912
    %46 = vst.msk [vmem:[#allocation0] sm:$0x1] %vm45, %v44
    %s47 = scalar_lea.vmem %s0, 8
    %v48 = vld [vmem:[%s47] sm:$0x1]
    %49 = vrot.lane.b32.xlu0 %v48, 64
    %v50 = vpop.permute.xlu0 %49
    %vm51 = vcmask 589312
    %52 = vst.msk [vmem:[#allocation0] sm:$0x1] %vm51, %v50
    %s53 = scalar_lea.vmem %s0, 7
    %v54 = vld [vmem:[%s53] sm:$0x1]
    %55 = vrot.lane.b32.xlu0 %v54, 56
    %v56 = vpop.permute.xlu0 %55
    %vm57 = vcmask 523712
    %58 = vst.msk [vmem:[#allocation0] sm:$0x1] %vm57, %v56
    %s59 = scalar_lea.vmem %s0, 6
    %v60 = vld [vmem:[%s59] sm:$0x1]
    %61 = vrot.lane.b32.xlu0 %v60, 48
    %v62 = vpop.permute.xlu0 %61
    %vm63 = vcmask 458112
    %64 = vst.msk [vmem:[#allocation0] sm:$0x1] %vm63, %v62
    %s65 = scalar_lea.vmem %s0, 5
    %v66 = vld [vmem:[%s65] sm:$0x1]
    %67 = vrot.lane.b32.xlu0 %v66, 40
    %v68 = vpop.permute.xlu0 %67
    %vm69 = vcmask 392512
    %70 = vst.msk [vmem:[#allocation0] sm:$0x1] %vm69, %v68
    %s71 = scalar_lea.vmem %s0, 4
    %v72 = vld [vmem:[%s71] sm:$0x1]
    %73 = vrot.lane.b32.xlu0 %v72, 32
    %v74 = vpop.permute.xlu0 %73
    %vm75 = vcmask 326912
    %76 = vst.msk [vmem:[#allocation0] sm:$0x1] %vm75, %v74
    %s77 = scalar_lea.vmem %s0, 3
    %v78 = vld [vmem:[%s77] sm:$0x1]
    %79 = vrot.lane.b32.xlu0 %v78, 24
    %v80 = vpop.permute.xlu0 %79
    %vm81 = vcmask 261312
    %82 = vst.msk [vmem:[#allocation0] sm:$0x1] %vm81, %v80
    %s83 = scalar_lea.vmem %s0, 2
    %v84 = vld [vmem:[%s83] sm:$0x1]
    %85 = vrot.lane.b32.xlu0 %v84, 16
    %v86 = vpop.permute.xlu0 %85
    %vm87 = vcmask 195712
    %88 = vst.msk [vmem:[#allocation0] sm:$0x1] %vm87, %v86
    %s89 = scalar_lea.vmem %s0, 1
    %v90 = vld [vmem:[%s89] sm:$0x1]
    %91 = vrot.lane.b32.xlu0 %v90, 8
    %v92 = vpop.permute.xlu0 %91
    %vm93 = vcmask 130112
    %94 = vst.msk [vmem:[#allocation0] sm:$0x1] %vm93, %v92
    %s96 = ssub.s32 2, 1
    %v97 = vld [vmem:[#allocation0] sm:%s96]
    %s99 = ssub.s32 2, 1
    %100 = vst [vmem:[%s1] sm:%s99] %v97

// kernel: residual_block.5
$region0: #{residual_block.5}
  #allocation0 [shape = 'u32[]', space=smem, size = 0x4, offset = 0x4, fixed_abs, tag = 'smem constant byte address 0x4 - core index']
  #allocation1 [shape = 'u32[72,128]{1,0:T(1,128)}', space=vmem, size = 0x9000, scoped, tag = 'internal scratch']
  %s0 = inlined_call_operand.vmem [shape: f32[2,16,128], index: 0, kind: input, shape index: {}]
  %s1 = inlined_call_operand.vmem [shape: f32[2,16,128], index: 1, kind: input, shape index: {}]
  %s2 = inlined_call_operand.vmem [shape: f32[1,128], index: 2, kind: input, shape index: {}]
  %s3 = inlined_call_operand.vmem [shape: f32[1,128], index: 3, kind: input, shape index: {}]
  %s4 = inlined_call_operand.vmem [shape: f32[2,16,128], index: 4, kind: output, shape index: {}]
  %s5 = sld [smem:[#allocation0]]
  $region49: #{residual_block.5} parent=0
    _
  %s7 = ssub.s32 1, %s5
  %s8 = scalar_select 0, %s7, %s5
  loop: start=0, step=1, limit=4
  $region2: #{residual_block.5} parent=0 // loop_pre_header
    _
  $region3: #{residual_block.5} parent=0 // loop_header
    %s10 = sphi 0, %s14
    %p11 = scmp.ge.s32.totalorder %s10, 4
    %s20 = sphi 0, %s22
    %s23 = sphi 0, %s20
    %s24 = sphi 0, %s23
    %s40 = sphi 0, %s24
    %s46 = sphi 0, %s48
    %s49 = sphi 0, %s46
    %s50 = sphi 0, %s49
    %s66 = sphi 0, %s50
    %s70 = sphi 0, %s70
    %s72 = sphi 0, %s70
    %s73 = sphi 0, %s72
    %s87 = sphi 0, %s73
    %s91 = sphi 0, %s91
    %s93 = sphi 0, %s91
    %s94 = sphi 0, %s93
    %s108 = sphi 0, %s94
    %s114 = sphi 0, %s116
    %s117 = sphi 0, %s114
    %s118 = sphi 0, %s117
    %s134 = sphi 0, %s118
  $region4: #{residual_block.5} parent=0 // loop_header_branch
    %13 = sbr.rel (%p11) target = $region8
  $region5: #{residual_block.5} parent=0 // loop_body
    %s15 = ssub.s32 %s10, 1
    %s16 = ssub.s32 %s10, 2
    %s17 = sadd.s32 %s10, 1
    %s18 = ssub.s32 %s10, %s17
    %p19 = scmp.eq.s32.totalorder %s18, 0
    %s21 = sadd.s32 %s20, 1
    %s22 = scalar_select %p19, %s20, %s21
    %p25 = pneg %p19
    %p26 = scmp.eq.s32.totalorder %s10, 1
    %p27 = por %p25, %p26
    %p28 = scmp.ne.s32.totalorder %s20, %s23
    %p29 = scmp.eq.s32.totalorder %s10, 0
    %p30 = por %p28, %p29
    %p31 = scmp.ne.s32.totalorder %s20, %s23
    %p32 = scmp.eq.s32.totalorder %s15, 1
    %p33 = por %p31, %p32
    %p34 = scmp.ne.s32.totalorder %s23, %s24
    %p35 = scmp.eq.s32.totalorder %s15, 0
    %p36 = por %p34, %p35
    %p37 = scmp.ne.s32.totalorder %s23, %s24
    %p38 = scmp.eq.s32.totalorder %s16, 1
    %p39 = por %p37, %p38
    %p41 = scmp.ne.s32.totalorder %s24, %s40
    %p42 = scmp.eq.s32.totalorder %s16, 0
    %p43 = por %p41, %p42
    %s44 = ssub.s32 %s10, %s17
    %p45 = scmp.eq.s32.totalorder %s44, 0
    %s47 = sadd.s32 %s46, 1
    %s48 = scalar_select %p45, %s46, %s47
    %p51 = pneg %p45
    %p52 = scmp.eq.s32.totalorder %s10, 1
    %p53 = por %p51, %p52
    %p54 = scmp.ne.s32.totalorder %s46, %s49
    %p55 = scmp.eq.s32.totalorder %s10, 0
    %p56 = por %p54, %p55
    %p57 = scmp.ne.s32.totalorder %s46, %s49
    %p58 = scmp.eq.s32.totalorder %s15, 1
    %p59 = por %p57, %p58
    %p60 = scmp.ne.s32.totalorder %s49, %s50
    %p61 = scmp.eq.s32.totalorder %s15, 0
    %p62 = por %p60, %p61
    %p63 = scmp.ne.s32.totalorder %s49, %s50
    %p64 = scmp.eq.s32.totalorder %s16, 1
    %p65 = por %p63, %p64
    %p67 = scmp.ne.s32.totalorder %s50, %s66
    %p68 = scmp.eq.s32.totalorder %s16, 0
    %p69 = por %p67, %p68
    %s71 = sadd.s32 %s70, 1
    %p74 = scmp.eq.s32.totalorder %s10, 1
    %p75 = scmp.ne.s32.totalorder %s70, %s72
    %p76 = scmp.eq.s32.totalorder %s10, 0
    %p77 = por %p75, %p76
    %p78 = scmp.ne.s32.totalorder %s70, %s72
    %p79 = scmp.eq.s32.totalorder %s15, 1
    %p80 = por %p78, %p79
    %p81 = scmp.ne.s32.totalorder %s72, %s73
    %p82 = scmp.eq.s32.totalorder %s15, 0
    %p83 = por %p81, %p82
    %p84 = scmp.ne.s32.totalorder %s72, %s73
    %p85 = scmp.eq.s32.totalorder %s16, 1
    %p86 = por %p84, %p85
    %p88 = scmp.ne.s32.totalorder %s73, %s87
    %p89 = scmp.eq.s32.totalorder %s16, 0
    %p90 = por %p88, %p89
    %s92 = sadd.s32 %s91, 1
    %p95 = scmp.eq.s32.totalorder %s10, 1
    %p96 = scmp.ne.s32.totalorder %s91, %s93
    %p97 = scmp.eq.s32.totalorder %s10, 0
    %p98 = por %p96, %p97
    %p99 = scmp.ne.s32.totalorder %s91, %s93
    %p100 = scmp.eq.s32.totalorder %s15, 1
    %p101 = por %p99, %p100
    %p102 = scmp.ne.s32.totalorder %s93, %s94
    %p103 = scmp.eq.s32.totalorder %s15, 0
    %p104 = por %p102, %p103
    %p105 = scmp.ne.s32.totalorder %s93, %s94
    %p106 = scmp.eq.s32.totalorder %s16, 1
    %p107 = por %p105, %p106
    %p109 = scmp.ne.s32.totalorder %s94, %s108
    %p110 = scmp.eq.s32.totalorder %s16, 0
    %p111 = por %p109, %p110
    %s112 = ssub.s32 %s10, %s17
    %p113 = scmp.eq.s32.totalorder %s112, 0
    %s115 = sadd.s32 %s114, 1
    %s116 = scalar_select %p113, %s114, %s115
    %p119 = pneg %p113
    %p120 = scmp.eq.s32.totalorder %s10, 1
    %p121 = por %p119, %p120
    %p122 = scmp.ne.s32.totalorder %s114, %s117
    %p123 = scmp.eq.s32.totalorder %s10, 0
    %p124 = por %p122, %p123
    %p125 = scmp.ne.s32.totalorder %s114, %s117
    %p126 = scmp.eq.s32.totalorder %s15, 1
    %p127 = por %p125, %p126
    %p128 = scmp.ne.s32.totalorder %s117, %s118
    %p129 = scmp.eq.s32.totalorder %s15, 0
    %p130 = por %p128, %p129
    %p131 = scmp.ne.s32.totalorder %s117, %s118
    %p132 = scmp.eq.s32.totalorder %s16, 1
    %p133 = por %p131, %p132
    %p135 = scmp.ne.s32.totalorder %s118, %s134
    %p136 = scmp.eq.s32.totalorder %s16, 0
    %p137 = por %p135, %p136
    %p138 = scmp.le.s32.totalorder 1, %s10
    %p139 = scmp.lt.s32.totalorder %s10, 3
    %p140 = pnand %p138, %p139
    %p141 = pneg %p140
    // Predicated region
    $region9: #{residual_block.5} parent=5 // pred_check
      _
    $region10: #{residual_block.5} parent=5 // pred_check_branch
      %143 = sbr.rel (%p140) target = $region12
    $region11: #{residual_block.5} parent=5 // pred_region
      %s144 = ssub.s32 %s10, 1
      // Predicated region
      $region13: #{residual_block.5} parent=11 // pred_check
        %p145 = pneg %p83
      $region14: #{residual_block.5} parent=11 // pred_check_branch
        %147 = sbr.rel (%p145) target = $region16
      $region15: #{residual_block.5} parent=11 // pred_region
        _
      $region16: #{residual_block.5} parent=11 // pred_fallthru
        _
      // Predicated region
      $region17: #{residual_block.5} parent=11 // pred_check
        %p148 = pneg %p104
      $region18: #{residual_block.5} parent=11 // pred_check_branch
        %150 = sbr.rel (%p148) target = $region20
      $region19: #{residual_block.5} parent=11 // pred_region
        _
      $region20: #{residual_block.5} parent=11 // pred_fallthru
        _
    $region12: #{residual_block.5} parent=5 // pred_fallthru
      _
    %p151 = scmp.lt.s32.totalorder %s10, 2
    // Predicated region
    $region21: #{residual_block.5} parent=5 // pred_check
      %p152 = pneg %p151
    $region22: #{residual_block.5} parent=5 // pred_check_branch
      %154 = sbr.rel (%p152) target = $region24
    $region23: #{residual_block.5} parent=5 // pred_region
      // Predicated region
      $region25: #{residual_block.5} parent=23 // pred_check
        %p155 = pneg %p30
      $region26: #{residual_block.5} parent=23 // pred_check_branch
        %157 = sbr.rel (%p155) target = $region28
      $region27: #{residual_block.5} parent=23 // pred_region
        %p158 = scmp.lt.s32.totalorder %s10, 1
        %s159 = scalar_select %p158, %s10, 1
        %s160 = smul.addr %s159, 2
        %s161 = smul.addr %s160, 8
        %s162 = scalar_lea.vmem %s0, %s161
      $region28: #{residual_block.5} parent=23 // pred_fallthru
        _
      // Predicated region
      $region29: #{residual_block.5} parent=23 // pred_check
        %p163 = pneg %p56
      $region30: #{residual_block.5} parent=23 // pred_check_branch
        %165 = sbr.rel (%p163) target = $region32
      $region31: #{residual_block.5} parent=23 // pred_region
        %p166 = scmp.lt.s32.totalorder %s10, 1
        %s167 = scalar_select %p166, %s10, 1
        %s168 = smul.addr %s167, 2
        %s169 = smul.addr %s168, 8
        %s170 = scalar_lea.vmem %s1, %s169
      $region32: #{residual_block.5} parent=23 // pred_fallthru
        _
    $region24: #{residual_block.5} parent=5 // pred_fallthru
      _
    %p171 = scmp.le.s32.totalorder 1, %s10
    %p172 = scmp.lt.s32.totalorder %s10, 3
    %p173 = pnand %p171, %p172
    %p174 = pneg %p173
    // Predicated region
    $region33: #{residual_block.5} parent=5 // pred_check
      _
    $region34: #{residual_block.5} parent=5 // pred_check_branch
      %176 = sbr.rel (%p173) target = $region36
    $region35: #{residual_block.5} parent=5 // pred_region
      %s177 = ssub.s32 %s10, 1
      %p178 = scmp.lt.s32.totalorder %s15, 1
      %s179 = scalar_select %p178, %s15, 1
      %s180 = smul.addr %s179, 2
      %s181 = smul.addr %s180, 8
      %s182 = scalar_lea.vmem %s0, %s181
      %p183 = pneg %p36
      %p184 = pneg %p33
      %p185 = scmp.lt.s32.totalorder %s15, 1
      %s186 = scalar_select %p185, %s15, 1
      %s187 = smul.addr %s186, 2
      %s188 = smul.addr %s187, 8
      %s189 = scalar_lea.vmem %s1, %s188
      %p190 = pneg %p62
      %p191 = pneg %p59
      %p192 = pneg %p83
      %p193 = pneg %p80
      %p194 = pneg %p104
      %p195 = pneg %p101
      %p196 = pneg %p130
      %p197 = pneg %p127
      %p198 = scmp.lt.s32.totalorder %s15, 1
      %s199 = scalar_select %p198, %s15, 1
      %s200 = smul.addr %s199, 2
      %s201 = smul.addr %s200, 8
      %s202 = scalar_lea.vmem %s4, %s201
      %p203 = scmp.lt.s32.totalorder %s15, 1
      %s204 = scalar_select %p203, %s15, 1
      %s205 = smul.addr %s204, 2
      %s206 = smul.addr %s205, 8
      %s207 = scalar_lea.vmem %s0, %s206
      %p208 = scmp.lt.s32.totalorder %s15, 1
      %s209 = scalar_select %p208, %s15, 1
      %s210 = smul.addr %s209, 2
      %s211 = smul.addr %s210, 8
      %s212 = scalar_lea.vmem %s1, %s211
      %p213 = scmp.lt.s32.totalorder %s15, 1
      %s214 = scalar_select %p213, %s15, 1
      %s215 = smul.addr %s214, 2
      %s216 = smul.addr %s215, 8
      %s217 = scalar_lea.vmem %s4, %s216
      %v218 = vld [vmem:[%s207] sm:$0xff]
      %v219 = vld [vmem:[%s207 + $0x8] sm:$0xff]
      %v220 = vld [vmem:[%s2] sm:$0x1]
      %v222 = vperm.slane %v220, 0
      %v224 = vmul.f32 %v218, %v222
      %v225 = vmul.f32 %v219, %v222
      %v226 = vld [vmem:[%s3] sm:$0x1]
      %v228 = vperm.slane %v226, 0
      %v230 = vadd.f32 %v224, %v228
      %v231 = vadd.f32 %v225, %v228
      %v232 = vld [vmem:[%s212] sm:$0xff]
      %v233 = vld [vmem:[%s212 + $0x8] sm:$0xff]
      %v234 = vadd.f32 %v230, %v232
      %v235 = vadd.f32 %v231, %v233
      %v236 = vmax.f32 %v234, 0.0
      %v237 = vmax.f32 %v235, 0.0
      %238 = vst [vmem:[%s217] sm:$0xff] %v236
      %239 = vst [vmem:[%s217 + $0x8] sm:$0xff] %v237
      %p240 = scmp.lt.s32.totalorder %s15, 1
      %s241 = scalar_select %p240, %s15, 1
      %s242 = smul.addr %s241, 2
      %s243 = smul.addr %s242, 8
      %s244 = scalar_lea.vmem %s4, %s243
      // Predicated region
      $region37: #{residual_block.5} parent=35 // pred_check
        %p245 = pneg %p127
      $region38: #{residual_block.5} parent=35 // pred_check_branch
        %247 = sbr.rel (%p245) target = $region40
      $region39: #{residual_block.5} parent=35 // pred_region
        _
      $region40: #{residual_block.5} parent=35 // pred_fallthru
        _
    $region36: #{residual_block.5} parent=5 // pred_fallthru
      _
    %p248 = scmp.le.s32.totalorder 2, %s10
    // Predicated region
    $region41: #{residual_block.5} parent=5 // pred_check
      %p249 = pneg %p248
    $region42: #{residual_block.5} parent=5 // pred_check_branch
      %251 = sbr.rel (%p249) target = $region44
    $region43: #{residual_block.5} parent=5 // pred_region
      %s252 = ssub.s32 %s10, 2
      // Predicated region
      $region45: #{residual_block.5} parent=43 // pred_check
        %p253 = pneg %p133
      $region46: #{residual_block.5} parent=43 // pred_check_branch
        %255 = sbr.rel (%p253) target = $region48
      $region47: #{residual_block.5} parent=43 // pred_region
        %p256 = scmp.lt.s32.totalorder %s16, 1
        %s257 = scalar_select %p256, %s16, 1
        %s258 = smul.addr %s257, 2
        %s259 = smul.addr %s258, 8
        %s260 = scalar_lea.vmem %s4, %s259
      $region48: #{residual_block.5} parent=43 // pred_fallthru
        _
    $region44: #{residual_block.5} parent=5 // pred_fallthru
      _
  $region6: #{residual_block.5} parent=0 // loop_footer
    %s14 = sadd.s32 1, %s10
  $region7: #{residual_block.5} parent=0 // loop_footer_branch
    %9 = sbr.rel target = $region3
  $region8: #{residual_block.5} parent=0 // loop_exit
    _

// kernel: residual_block.3
$region0: #{residual_block.3}
  #allocation0 [shape = 'u32[]', space=smem, size = 0x4, offset = 0x4, fixed_abs, tag = 'smem constant byte address 0x4 - core index']
  #allocation1 [shape = 'u32[72,128]{1,0:T(1,128)}', space=vmem, size = 0x9000, scoped, tag = 'internal scratch']
  #allocation2 [shape = 'f32[18,136]{1,0:T(8,128)}', space=vmem, size = 0x6000, scoped, tag = 'scratch operand']
  %s0 = inlined_call_operand.vmem [shape: f32[2,16,128], index: 0, kind: input, shape index: {}]
  %s1 = inlined_call_operand.vmem [shape: f32[3,136,128], index: 1, kind: input, shape index: {}]
  %s2 = inlined_call_operand.vmem [shape: f32[2,16,128], index: 2, kind: output, shape index: {0}]
  %s3 = inlined_call_operand.vmem [shape: f32[2,1,128], index: 3, kind: output, shape index: {1}]
  %s4 = inlined_call_operand.vmem [shape: f32[2,1,128], index: 4, kind: output, shape index: {2}]
  %5 = xla_tuple %s2, %s3, %s4
  %s6 = sld [smem:[#allocation0]]
  $region57: #{residual_block.3} parent=0
    _
  %s8 = ssub.s32 1, %s6
  %s9 = scalar_select 0, %s8, %s6
  loop: start=0, step=1, limit=4
  $region2: #{residual_block.3} parent=0 // loop_pre_header
    _
  $region3: #{residual_block.3} parent=0 // loop_header
    %s11 = sphi 0, %s15
    %p12 = scmp.ge.s32.totalorder %s11, 4
    %s21 = sphi 0, %s23
    %s24 = sphi 0, %s21
    %s25 = sphi 0, %s24
    %s41 = sphi 0, %s25
    %s45 = sphi 0, %s45
    %s47 = sphi 0, %s45
    %s48 = sphi 0, %s47
    %s62 = sphi 0, %s48
    %s68 = sphi 0, %s70
    %s71 = sphi 0, %s68
    %s72 = sphi 0, %s71
    %s88 = sphi 0, %s72
    %s94 = sphi 0, %s96
    %s97 = sphi 0, %s94
    %s98 = sphi 0, %s97
    %s114 = sphi 0, %s98
    %s120 = sphi 0, %s122
    %s123 = sphi 0, %s120
    %s124 = sphi 0, %s123
    %s140 = sphi 0, %s124
  $region4: #{residual_block.3} parent=0 // loop_header_branch
    %14 = sbr.rel (%p12) target = $region8
  $region5: #{residual_block.3} parent=0 // loop_body
    %s16 = ssub.s32 %s11, 1
    %s17 = ssub.s32 %s11, 2
    %s18 = sadd.s32 %s11, 1
    %s19 = ssub.s32 %s11, %s18
    %p20 = scmp.eq.s32.totalorder %s19, 0
    %s22 = sadd.s32 %s21, 1
    %s23 = scalar_select %p20, %s21, %s22
    %p26 = pneg %p20
    %p27 = scmp.eq.s32.totalorder %s11, 1
    %p28 = por %p26, %p27
    %p29 = scmp.ne.s32.totalorder %s21, %s24
    %p30 = scmp.eq.s32.totalorder %s11, 0
    %p31 = por %p29, %p30
    %p32 = scmp.ne.s32.totalorder %s21, %s24
    %p33 = scmp.eq.s32.totalorder %s16, 1
    %p34 = por %p32, %p33
    %p35 = scmp.ne.s32.totalorder %s24, %s25
    %p36 = scmp.eq.s32.totalorder %s16, 0
    %p37 = por %p35, %p36
    %p38 = scmp.ne.s32.totalorder %s24, %s25
    %p39 = scmp.eq.s32.totalorder %s17, 1
    %p40 = por %p38, %p39
    %p42 = scmp.ne.s32.totalorder %s25, %s41
    %p43 = scmp.eq.s32.totalorder %s17, 0
    %p44 = por %p42, %p43
    %s46 = sadd.s32 %s45, 1
    %p49 = scmp.eq.s32.totalorder %s11, 1
    %p50 = scmp.ne.s32.totalorder %s45, %s47
    %p51 = scmp.eq.s32.totalorder %s11, 0
    %p52 = por %p50, %p51
    %p53 = scmp.ne.s32.totalorder %s45, %s47
    %p54 = scmp.eq.s32.totalorder %s16, 1
    %p55 = por %p53, %p54
    %p56 = scmp.ne.s32.totalorder %s47, %s48
    %p57 = scmp.eq.s32.totalorder %s16, 0
    %p58 = por %p56, %p57
    %p59 = scmp.ne.s32.totalorder %s47, %s48
    %p60 = scmp.eq.s32.totalorder %s17, 1
    %p61 = por %p59, %p60
    %p63 = scmp.ne.s32.totalorder %s48, %s62
    %p64 = scmp.eq.s32.totalorder %s17, 0
    %p65 = por %p63, %p64
    %s66 = ssub.s32 %s11, %s18
    %p67 = scmp.eq.s32.totalorder %s66, 0
    %s69 = sadd.s32 %s68, 1
    %s70 = scalar_select %p67, %s68, %s69
    %p73 = pneg %p67
    %p74 = scmp.eq.s32.totalorder %s11, 1
    %p75 = por %p73, %p74
    %p76 = scmp.ne.s32.totalorder %s68, %s71
    %p77 = scmp.eq.s32.totalorder %s11, 0
    %p78 = por %p76, %p77
    %p79 = scmp.ne.s32.totalorder %s68, %s71
    %p80 = scmp.eq.s32.totalorder %s16, 1
    %p81 = por %p79, %p80
    %p82 = scmp.ne.s32.totalorder %s71, %s72
    %p83 = scmp.eq.s32.totalorder %s16, 0
    %p84 = por %p82, %p83
    %p85 = scmp.ne.s32.totalorder %s71, %s72
    %p86 = scmp.eq.s32.totalorder %s17, 1
    %p87 = por %p85, %p86
    %p89 = scmp.ne.s32.totalorder %s72, %s88
    %p90 = scmp.eq.s32.totalorder %s17, 0
    %p91 = por %p89, %p90
    %s92 = ssub.s32 %s11, %s18
    %p93 = scmp.eq.s32.totalorder %s92, 0
    %s95 = sadd.s32 %s94, 1
    %s96 = scalar_select %p93, %s94, %s95
    %p99 = pneg %p93
    %p100 = scmp.eq.s32.totalorder %s11, 1
    %p101 = por %p99, %p100
    %p102 = scmp.ne.s32.totalorder %s94, %s97
    %p103 = scmp.eq.s32.totalorder %s11, 0
    %p104 = por %p102, %p103
    %p105 = scmp.ne.s32.totalorder %s94, %s97
    %p106 = scmp.eq.s32.totalorder %s16, 1
    %p107 = por %p105, %p106
    %p108 = scmp.ne.s32.totalorder %s97, %s98
    %p109 = scmp.eq.s32.totalorder %s16, 0
    %p110 = por %p108, %p109
    %p111 = scmp.ne.s32.totalorder %s97, %s98
    %p112 = scmp.eq.s32.totalorder %s17, 1
    %p113 = por %p111, %p112
    %p115 = scmp.ne.s32.totalorder %s98, %s114
    %p116 = scmp.eq.s32.totalorder %s17, 0
    %p117 = por %p115, %p116
    %s118 = ssub.s32 %s11, %s18
    %p119 = scmp.eq.s32.totalorder %s118, 0
    %s121 = sadd.s32 %s120, 1
    %s122 = scalar_select %p119, %s120, %s121
    %p125 = pneg %p119
    %p126 = scmp.eq.s32.totalorder %s11, 1
    %p127 = por %p125, %p126
    %p128 = scmp.ne.s32.totalorder %s120, %s123
    %p129 = scmp.eq.s32.totalorder %s11, 0
    %p130 = por %p128, %p129
    %p131 = scmp.ne.s32.totalorder %s120, %s123
    %p132 = scmp.eq.s32.totalorder %s16, 1
    %p133 = por %p131, %p132
    %p134 = scmp.ne.s32.totalorder %s123, %s124
    %p135 = scmp.eq.s32.totalorder %s16, 0
    %p136 = por %p134, %p135
    %p137 = scmp.ne.s32.totalorder %s123, %s124
    %p138 = scmp.eq.s32.totalorder %s17, 1
    %p139 = por %p137, %p138
    %p141 = scmp.ne.s32.totalorder %s124, %s140
    %p142 = scmp.eq.s32.totalorder %s17, 0
    %p143 = por %p141, %p142
    %p144 = scmp.le.s32.totalorder 1, %s11
    %p145 = scmp.lt.s32.totalorder %s11, 3
    %p146 = pnand %p144, %p145
    %p147 = pneg %p146
    // Predicated region
    $region9: #{residual_block.3} parent=5 // pred_check
      _
    $region10: #{residual_block.3} parent=5 // pred_check_branch
      %149 = sbr.rel (%p146) target = $region12
    $region11: #{residual_block.3} parent=5 // pred_region
      %s150 = ssub.s32 %s11, 1
      // Predicated region
      $region13: #{residual_block.3} parent=11 // pred_check
        %p151 = pneg %p58
      $region14: #{residual_block.3} parent=11 // pred_check_branch
        %153 = sbr.rel (%p151) target = $region16
      $region15: #{residual_block.3} parent=11 // pred_region
        _
      $region16: #{residual_block.3} parent=11 // pred_fallthru
        _
    $region12: #{residual_block.3} parent=5 // pred_fallthru
      _
    %p154 = scmp.lt.s32.totalorder %s11, 2
    // Predicated region
    $region17: #{residual_block.3} parent=5 // pred_check
      %p155 = pneg %p154
    $region18: #{residual_block.3} parent=5 // pred_check_branch
      %157 = sbr.rel (%p155) target = $region20
    $region19: #{residual_block.3} parent=5 // pred_region
      // Predicated region
      $region21: #{residual_block.3} parent=19 // pred_check
        %p158 = pneg %p31
      $region22: #{residual_block.3} parent=19 // pred_check_branch
        %160 = sbr.rel (%p158) target = $region24
      $region23: #{residual_block.3} parent=19 // pred_region
        %p161 = scmp.lt.s32.totalorder %s11, 1
        %s162 = scalar_select %p161, %s11, 1
        %s163 = smul.addr %s162, 2
        %s164 = smul.addr %s163, 8
        %s165 = scalar_lea.vmem %s0, %s164
      $region24: #{residual_block.3} parent=19 // pred_fallthru
        _
    $region20: #{residual_block.3} parent=5 // pred_fallthru
      _
    %p166 = scmp.le.s32.totalorder 1, %s11
    %p167 = scmp.lt.s32.totalorder %s11, 3
    %p168 = pnand %p166, %p167
    %p169 = pneg %p168
    // Predicated region
    $region25: #{residual_block.3} parent=5 // pred_check
      _
    $region26: #{residual_block.3} parent=5 // pred_check_branch
      %171 = sbr.rel (%p168) target = $region28
    $region27: #{residual_block.3} parent=5 // pred_region
      %s172 = ssub.s32 %s11, 1
      %p173 = scmp.lt.s32.totalorder %s16, 1
      %s174 = scalar_select %p173, %s16, 1
      %s175 = smul.addr %s174, 2
      %s176 = smul.addr %s175, 8
      %s177 = scalar_lea.vmem %s0, %s176
      %p178 = pneg %p37
      %p179 = pneg %p34
      %p180 = pneg %p58
      %p181 = pneg %p55
      %p182 = pneg %p84
      %p183 = pneg %p81
      %p184 = scmp.lt.s32.totalorder %s16, 1
      %s185 = scalar_select %p184, %s16, 1
      %s186 = smul.addr %s185, 2
      %s187 = smul.addr %s186, 8
      %s188 = scalar_lea.vmem %s2, %s187
      %p189 = pneg %p110
      %p190 = pneg %p107
      %p191 = scmp.lt.s32.totalorder %s16, 1
      %s192 = scalar_select %p191, %s16, 1
      %s193 = scalar_lea.vmem %s3, %s192
      %p194 = pneg %p136
      %p195 = pneg %p133
      %p196 = scmp.lt.s32.totalorder %s16, 1
      %s197 = scalar_select %p196, %s16, 1
      %s198 = scalar_lea.vmem %s4, %s197
      %p199 = scmp.lt.s32.totalorder %s16, 1
      %s200 = scalar_select %p199, %s16, 1
      %s201 = smul.addr %s200, 2
      %s202 = smul.addr %s201, 8
      %s203 = scalar_lea.vmem %s0, %s202
      %p204 = scmp.lt.s32.totalorder %s16, 1
      %s205 = scalar_select %p204, %s16, 1
      %s206 = smul.addr %s205, 2
      %s207 = smul.addr %s206, 8
      %s208 = scalar_lea.vmem %s2, %s207
      %p209 = scmp.lt.s32.totalorder %s16, 1
      %s210 = scalar_select %p209, %s16, 1
      %s211 = scalar_lea.vmem %s3, %s210
      %p212 = scmp.lt.s32.totalorder %s16, 1
      %s213 = scalar_select %p212, %s16, 1
      %s214 = scalar_lea.vmem %s4, %s213
      %215 = vst [vmem:[#allocation2] sm:$0xff] 0.0
      %vm216 = vcmask 64512
      %217 = vst.msk [vmem:[#allocation2 + $0x8] sm:$0xff] %vm216, 0.0
      %218 = vst [vmem:[#allocation2 + $0x10] sm:$0xff] 0.0
      %219 = vst.msk [vmem:[#allocation2 + $0x18] sm:$0xff] %vm216, 0.0
      %220 = vst [vmem:[#allocation2 + $0x20] sm:$0x3] 0.0
      %vm221 = vcmask 58368
      %222 = vst.msk [vmem:[#allocation2 + $0x28] sm:$0x3] %vm221, 0.0
      %v223 = vld [vmem:[%s203] sm:$0xff]
      %v224 = vld [vmem:[%s203 + $0x8] sm:$0xff]
      %vm227 = vcmask 1040384
      %v228 = vrot.slane %v223, 7
      %v229 = vrot.slane %v224, 7
      %v230 = vsel %vm227, %v228, %v229
      %234 = vst [vmem:[#allocation2] sm:$0xfe] %v228
      %235 = vst [vmem:[#allocation2 + $0x10] sm:$0xff] %v230
      %236 = vst [vmem:[#allocation2 + $0x20] sm:$0x1] %v229
      %v237 = vld [vmem:[#allocation2] sm:$0xff]
      %v238 = vld [vmem:[#allocation2 + $0x8] sm:$0xff]
      %v239 = vld [vmem:[#allocation2 + $0x10] sm:$0xff]
      %v240 = vld [vmem:[#allocation2 + $0x18] sm:$0xff]
      %v241 = vld [vmem:[%s1] sm:$0xff]
      %v242 = vld [vmem:[%s1 + $0x8] sm:$0xff]
      %v243 = vld [vmem:[%s1 + $0x10] sm:$0xff]
      %v244 = vld [vmem:[%s1 + $0x18] sm:$0xff]
      %v245 = vld [vmem:[%s1 + $0x20] sm:$0xff]
      %v246 = vld [vmem:[%s1 + $0x28] sm:$0xff]
      %v247 = vld [vmem:[%s1 + $0x30] sm:$0xff]
      %v248 = vld [vmem:[%s1 + $0x38] sm:$0xff]
      %v249 = vld [vmem:[%s1 + $0x40] sm:$0xff]
      %v250 = vld [vmem:[%s1 + $0x48] sm:$0xff]
      %v251 = vld [vmem:[%s1 + $0x50] sm:$0xff]
      %v252 = vld [vmem:[%s1 + $0x58] sm:$0xff]
      %v253 = vld [vmem:[%s1 + $0x60] sm:$0xff]
      %v254 = vld [vmem:[%s1 + $0x68] sm:$0xff]
      %v255 = vld [vmem:[%s1 + $0x70] sm:$0xff]
      %v256 = vld [vmem:[%s1 + $0x78] sm:$0xff]
      %v257 = vld [vmem:[%s1 + $0x80] sm:$0xff]
      %v258 = vld [vmem:[#allocation2] sm:$0xfe]
      %v259 = vld [vmem:[#allocation2 + $0x8] sm:$0xfe]
      %v260 = vld [vmem:[#allocation2 + $0x20] sm:$0x1]
      %v261 = vld [vmem:[#allocation2 + $0x28] sm:$0x1]
      %s262 = scalar_lea.vmem %s1, 136
      %v263 = vld [vmem:[%s262] sm:$0xff]
      %v264 = vld [vmem:[%s262 + $0x8] sm:$0xff]
      %v265 = vld [vmem:[%s262 + $0x10] sm:$0xff]
      %v266 = vld [vmem:[%s262 + $0x18] sm:$0xff]
      %v267 = vld [vmem:[%s262 + $0x20] sm:$0xff]
      %v268 = vld [vmem:[%s262 + $0x28] sm:$0xff]
      %v269 = vld [vmem:[%s262 + $0x30] sm:$0xff]
      %v270 = vld [vmem:[%s262 + $0x38] sm:$0xff]
      %v271 = vld [vmem:[%s262 + $0x40] sm:$0xff]
      %v272 = vld [vmem:[%s262 + $0x48] sm:$0xff]
      %v273 = vld [vmem:[%s262 + $0x50] sm:$0xff]
      %v274 = vld [vmem:[%s262 + $0x58] sm:$0xff]
      %v275 = vld [vmem:[%s262 + $0x60] sm:$0xff]
      %v276 = vld [vmem:[%s262 + $0x68] sm:$0xff]
      %v277 = vld [vmem:[%s262 + $0x70] sm:$0xff]
      %v278 = vld [vmem:[%s262 + $0x78] sm:$0xff]
      %v279 = vld [vmem:[%s262 + $0x80] sm:$0xff]
      %vm286 = vcmask 1046528
      %v287 = vrot.slane %v258, 1
      %v288 = vrot.slane %v239, 1
      %v289 = vsel %vm286, %v287, %v288
      %v290 = vrot.slane %v259, 1
      %v291 = vrot.slane %v240, 1
      %v292 = vsel %vm286, %v290, %v291
      %v293 = vrot.slane %v260, 1
      %v294 = vsel %vm286, %v288, %v293
      %v295 = vrot.slane %v261, 1
      %v296 = vsel %vm286, %v291, %v295
      %v299 = vsel %vm216, %v292, 0
      %v301 = vsel %vm216, %v296, 0
      %303 = vmatpush.msra.mxu0 %v278
      %304 = vmatpush.msra.mxu0 %v277
      %305 = vmatpush.msra.mxu0 %v276
      %306 = vmatpush.msra.mxu0 %v275
      %307 = vmatpush.msra.mxu0 %v274
      %308 = vmatpush.msra.mxu0 %v273
      %309 = vmatpush.msra.mxu0 %v272
      %310 = vmatpush.msra.mxu0 %v271
      %311 = vmatpush.msra.mxu0 %v270
      %312 = vmatpush.msra.mxu0 %v269
      %313 = vmatpush.msra.mxu0 %v268
      %314 = vmatpush.msra.mxu0 %v267
      %315 = vmatpush.msra.mxu0 %v266
      %316 = vmatpush.msra.mxu0 %v265
      %317 = vmatpush.msra.mxu0 %v264
      %318 = vmatpush.msra.mxu0 %v263
      %319 = vmatmul.f32.gmra.mxu0 %v289
      %v320 = vpop.f32.mrf.mxu0
      %v321 = vadd.f32 0.0, %v320
      %322 = vmatmul.f32.gmra.mxu0 %v294
      %v323 = vpop.f32.mrf.mxu0
      %v324 = vadd.f32 0.0, %v323
      %325 = vdwg.mxu0
      %326 = vmatpush.msra.mxu0 0.0
      %327 = vmatpush.msra.mxu0 0.0
      %328 = vmatpush.msra.mxu0 0.0
      %329 = vmatpush.msra.mxu0 0.0
      %330 = vmatpush.msra.mxu0 0.0
      %331 = vmatpush.msra.mxu0 0.0
      %332 = vmatpush.msra.mxu0 0.0
      %333 = vmatpush.msra.mxu0 0.0
      %334 = vmatpush.msra.mxu0 0.0
      %335 = vmatpush.msra.mxu0 0.0
      %336 = vmatpush.msra.mxu0 0.0
      %337 = vmatpush.msra.mxu0 0.0
      %338 = vmatpush.msra.mxu0 0.0
      %339 = vmatpush.msra.mxu0 0.0
      %340 = vmatpush.msra.mxu0 0.0
      %341 = vmatpush.msra.mxu0 %v279
      %342 = vmatmul.f32.gmra.mxu0 %v299
      %v343 = vpop.f32.mrf.mxu0
      %v344 = vadd.f32 %v321, %v343
      %345 = vmatmul.f32.gmra.mxu0 %v301
      %v346 = vpop.f32.mrf.mxu0
      %v347 = vadd.f32 %v324, %v346
      %348 = vdwg.mxu0
      %v350 = vsel %vm216, %v238, 0
      %v352 = vsel %vm216, %v240, 0
      %354 = vmatpush.msra.mxu0 %v256
      %355 = vmatpush.msra.mxu0 %v255
      %356 = vmatpush.msra.mxu0 %v254
      %357 = vmatpush.msra.mxu0 %v253
      %358 = vmatpush.msra.mxu0 %v252
      %359 = vmatpush.msra.mxu0 %v251
      %360 = vmatpush.msra.mxu0 %v250
      %361 = vmatpush.msra.mxu0 %v249
      %362 = vmatpush.msra.mxu0 %v248
      %363 = vmatpush.msra.mxu0 %v247
      %364 = vmatpush.msra.mxu0 %v246
      %365 = vmatpush.msra.mxu0 %v245
      %366 = vmatpush.msra.mxu0 %v244
      %367 = vmatpush.msra.mxu0 %v243
      %368 = vmatpush.msra.mxu0 %v242
      %369 = vmatpush.msra.mxu0 %v241
      %370 = vmatmul.f32.gmra.mxu0 %v237
      %v371 = vpop.f32.mrf.mxu0
      %v372 = vadd.f32 %v344, %v371
      %373 = vmatmul.f32.gmra.mxu0 %v239
      %v374 = vpop.f32.mrf.mxu0
      %v375 = vadd.f32 %v347, %v374
      %376 = vdwg.mxu0
      %377 = vmatpush.msra.mxu0 0.0
      %378 = vmatpush.msra.mxu0 0.0
      %379 = vmatpush.msra.mxu0 0.0
      %380 = vmatpush.msra.mxu0 0.0
      %381 = vmatpush.msra.mxu0 0.0
      %382 = vmatpush.msra.mxu0 0.0
      %383 = vmatpush.msra.mxu0 0.0
      %384 = vmatpush.msra.mxu0 0.0
      %385 = vmatpush.msra.mxu0 0.0
      %386 = vmatpush.msra.mxu0 0.0
      %387 = vmatpush.msra.mxu0 0.0
      %388 = vmatpush.msra.mxu0 0.0
      %389 = vmatpush.msra.mxu0 0.0
      %390 = vmatpush.msra.mxu0 0.0
      %391 = vmatpush.msra.mxu0 0.0
      %392 = vmatpush.msra.mxu0 %v257
      %393 = vmatmul.f32.gmra.mxu0 %v350
      %v394 = vpop.f32.mrf.mxu0
      %v395 = vadd.f32 %v372, %v394
      %396 = vmatmul.f32.gmra.mxu0 %v352
      %v397 = vpop.f32.mrf.mxu0
      %v398 = vadd.f32 %v375, %v397
      %399 = vdwg.mxu0
      %v400 = vld [vmem:[#allocation2] sm:$0xfc]
      %v401 = vld [vmem:[#allocation2 + $0x8] sm:$0xfc]
      %v402 = vld [vmem:[#allocation2 + $0x20] sm:$0x3]
      %v403 = vld [vmem:[#allocation2 + $0x28] sm:$0x3]
      %s404 = scalar_lea.vmem %s1, 272
      %v405 = vld [vmem:[%s404] sm:$0xff]
      %v406 = vld [vmem:[%s404 + $0x8] sm:$0xff]
      %v407 = vld [vmem:[%s404 + $0x10] sm:$0xff]
      %v408 = vld [vmem:[%s404 + $0x18] sm:$0xff]
      %v409 = vld [vmem:[%s404 + $0x20] sm:$0xff]
      %v410 = vld [vmem:[%s404 + $0x28] sm:$0xff]
      %v411 = vld [vmem:[%s404 + $0x30] sm:$0xff]
      %v412 = vld [vmem:[%s404 + $0x38] sm:$0xff]
      %v413 = vld [vmem:[%s404 + $0x40] sm:$0xff]
      %v414 = vld [vmem:[%s404 + $0x48] sm:$0xff]
      %v415 = vld [vmem:[%s404 + $0x50] sm:$0xff]
      %v416 = vld [vmem:[%s404 + $0x58] sm:$0xff]
      %v417 = vld [vmem:[%s404 + $0x60] sm:$0xff]
      %v418 = vld [vmem:[%s404 + $0x68] sm:$0xff]
      %v419 = vld [vmem:[%s404 + $0x70] sm:$0xff]
      %v420 = vld [vmem:[%s404 + $0x78] sm:$0xff]
      %v421 = vld [vmem:[%s404 + $0x80] sm:$0xff]
      %vm426 = vcmask 1045504
      %v427 = vrot.slane %v400, 2
      %v428 = vrot.slane %v239, 2
      %v429 = vsel %vm426, %v427, %v428
      %v430 = vrot.slane %v401, 2
      %v431 = vrot.slane %v240, 2
      %v432 = vsel %vm426, %v430, %v431
      %v433 = vrot.slane %v402, 2
      %v434 = vsel %vm426, %v428, %v433
      %v435 = vrot.slane %v403, 2
      %v436 = vsel %vm426, %v431, %v435
      %v439 = vsel %vm216, %v432, 0
      %v441 = vsel %vm216, %v436, 0
      %443 = vmatpush.msra.mxu0 %v420
      %444 = vmatpush.msra.mxu0 %v419
      %445 = vmatpush.msra.mxu0 %v418
      %446 = vmatpush.msra.mxu0 %v417
      %447 = vmatpush.msra.mxu0 %v416
      %448 = vmatpush.msra.mxu0 %v415
      %449 = vmatpush.msra.mxu0 %v414
      %450 = vmatpush.msra.mxu0 %v413
      %451 = vmatpush.msra.mxu0 %v412
      %452 = vmatpush.msra.mxu0 %v411
      %453 = vmatpush.msra.mxu0 %v410
      %454 = vmatpush.msra.mxu0 %v409
      %455 = vmatpush.msra.mxu0 %v408
      %456 = vmatpush.msra.mxu0 %v407
      %457 = vmatpush.msra.mxu0 %v406
      %458 = vmatpush.msra.mxu0 %v405
      %459 = vmatmul.f32.gmra.mxu0 %v429
      %v460 = vpop.f32.mrf.mxu0
      %v461 = vadd.f32 0.0, %v460
      %462 = vmatmul.f32.gmra.mxu0 %v434
      %v463 = vpop.f32.mrf.mxu0
      %v464 = vadd.f32 0.0, %v463
      %465 = vdwg.mxu0
      %466 = vmatpush.msra.mxu0 0.0
      %467 = vmatpush.msra.mxu0 0.0
      %468 = vmatpush.msra.mxu0 0.0
      %469 = vmatpush.msra.mxu0 0.0
      %470 = vmatpush.msra.mxu0 0.0
      %471 = vmatpush.msra.mxu0 0.0
      %472 = vmatpush.msra.mxu0 0.0
      %473 = vmatpush.msra.mxu0 0.0
      %474 = vmatpush.msra.mxu0 0.0
      %475 = vmatpush.msra.mxu0 0.0
      %476 = vmatpush.msra.mxu0 0.0
      %477 = vmatpush.msra.mxu0 0.0
      %478 = vmatpush.msra.mxu0 0.0
      %479 = vmatpush.msra.mxu0 0.0
      %480 = vmatpush.msra.mxu0 0.0
      %481 = vmatpush.msra.mxu0 %v421
      %482 = vmatmul.f32.gmra.mxu0 %v439
      %v483 = vpop.f32.mrf.mxu0
      %v484 = vadd.f32 %v461, %v483
      %485 = vmatmul.f32.gmra.mxu0 %v441
      %v486 = vpop.f32.mrf.mxu0
      %v487 = vadd.f32 %v464, %v486
      %488 = vdwg.mxu0
      %v489 = vadd.f32 %v395, %v484
      %v490 = vadd.f32 %v398, %v487
      %491 = vst [vmem:[%s208] sm:$0xff] %v489
      %492 = vst [vmem:[%s208 + $0x8] sm:$0xff] %v490
      %v493 = vadd.f32 %v489, %v490
      %v494 = vrot.slane %v493, 4
      %v495 = vadd.f32 %v493, %v494
      %v496 = vrot.slane %v495, 2
      %v497 = vadd.f32 %v495, %v496
      %v498 = vrot.slane %v497, 1
      %v499 = vadd.f32 %v497, %v498
      %v500 = vrcp.pop 16.0
      %v501 = vmul.f32 16.0, %v500
      %v502 = vsub.f32 1.0, %v501
      %v503 = vmul.f32 %v500, %v502
      %v504 = vadd.f32 %v500, %v503
      %vm505 = vweird.f32 %v500
      %v506 = vsel %vm505, %v500, %v504
      %v507 = vmul.f32 %v499, %v506
      %508 = vst [vmem:[%s211] sm:$0x1] %v507
      %v509 = vsub.f32 %v489, %v507
      %v510 = vsub.f32 %v490, %v507
      %v511 = vmul.f32 %v509, %v509
      %v512 = vmul.f32 %v510, %v510
      %v513 = vadd.f32 %v511, %v512
      %v514 = vrot.slane %v513, 4
      %v515 = vadd.f32 %v513, %v514
      %v516 = vrot.slane %v515, 2
      %v517 = vadd.f32 %v515, %v516
      %v518 = vrot.slane %v517, 1
      %v519 = vadd.f32 %v517, %v518
      %520 = vst [vmem:[%s214] sm:$0x1] %v519
      %p521 = scmp.lt.s32.totalorder %s16, 1
      %s522 = scalar_select %p521, %s16, 1
      %s523 = smul.addr %s522, 2
      %s524 = smul.addr %s523, 8
      %s525 = scalar_lea.vmem %s2, %s524
      %p526 = scmp.lt.s32.totalorder %s16, 1
      %s527 = scalar_select %p526, %s16, 1
      %s528 = scalar_lea.vmem %s3, %s527
      %p529 = scmp.lt.s32.totalorder %s16, 1
      %s530 = scalar_select %p529, %s16, 1
      %s531 = scalar_lea.vmem %s4, %s530
      // Predicated region
      $region29: #{residual_block.3} parent=27 // pred_check
        %p532 = pneg %p81
      $region30: #{residual_block.3} parent=27 // pred_check_branch
        %534 = sbr.rel (%p532) target = $region32
      $region31: #{residual_block.3} parent=27 // pred_region
        _
      $region32: #{residual_block.3} parent=27 // pred_fallthru
        _
      // Predicated region
      $region33: #{residual_block.3} parent=27 // pred_check
        %p535 = pneg %p107
      $region34: #{residual_block.3} parent=27 // pred_check_branch
        %537 = sbr.rel (%p535) target = $region36
      $region35: #{residual_block.3} parent=27 // pred_region
        _
      $region36: #{residual_block.3} parent=27 // pred_fallthru
        _
      // Predicated region
      $region37: #{residual_block.3} parent=27 // pred_check
        %p538 = pneg %p133
      $region38: #{residual_block.3} parent=27 // pred_check_branch
        %540 = sbr.rel (%p538) target = $region40
      $region39: #{residual_block.3} parent=27 // pred_region
        _
      $region40: #{residual_block.3} parent=27 // pred_fallthru
        _
    $region28: #{residual_block.3} parent=5 // pred_fallthru
      _
    %p541 = scmp.le.s32.totalorder 2, %s11
    // Predicated region
    $region41: #{residual_block.3} parent=5 // pred_check
      %p542 = pneg %p541
    $region42: #{residual_block.3} parent=5 // pred_check_branch
      %544 = sbr.rel (%p542) target = $region44
    $region43: #{residual_block.3} parent=5 // pred_region
      %s545 = ssub.s32 %s11, 2
      // Predicated region
      $region45: #{residual_block.3} parent=43 // pred_check
        %p546 = pneg %p87
      $region46: #{residual_block.3} parent=43 // pred_check_branch
        %548 = sbr.rel (%p546) target = $region48
      $region47: #{residual_block.3} parent=43 // pred_region
        %p549 = scmp.lt.s32.totalorder %s17, 1
        %s550 = scalar_select %p549, %s17, 1
        %s551 = smul.addr %s550, 2
        %s552 = smul.addr %s551, 8
        %s553 = scalar_lea.vmem %s2, %s552
      $region48: #{residual_block.3} parent=43 // pred_fallthru
        _
      // Predicated region
      $region49: #{residual_block.3} parent=43 // pred_check
        %p554 = pneg %p113
      $region50: #{residual_block.3} parent=43 // pred_check_branch
        %556 = sbr.rel (%p554) target = $region52
      $region51: #{residual_block.3} parent=43 // pred_region
        %p557 = scmp.lt.s32.totalorder %s17, 1
        %s558 = scalar_select %p557, %s17, 1
        %s559 = scalar_lea.vmem %s3, %s558
      $region52: #{residual_block.3} parent=43 // pred_fallthru
        _
      // Predicated region
      $region53: #{residual_block.3} parent=43 // pred_check
        %p560 = pneg %p139
      $region54: #{residual_block.3} parent=43 // pred_check_branch
        %562 = sbr.rel (%p560) target = $region56
      $region55: #{residual_block.3} parent=43 // pred_region
        %p563 = scmp.lt.s32.totalorder %s17, 1
        %s564 = scalar_select %p563, %s17, 1
        %s565 = scalar_lea.vmem %s4, %s564
      $region56: #{residual_block.3} parent=43 // pred_fallthru
        _
    $region44: #{residual_block.3} parent=5 // pred_fallthru
      _
  $region6: #{residual_block.3} parent=0 // loop_footer
    %s15 = sadd.s32 1, %s11
  $region7: #{residual_block.3} parent=0 // loop_footer_branch
    %10 = sbr.rel target = $region3
  $region8: #{residual_block.3} parent=0 // loop_exit
    _

// kernel: residual_block.4
$region0: #{residual_block.4}
  #allocation0 [shape = 'u32[]', space=smem, size = 0x4, offset = 0x4, fixed_abs, tag = 'smem constant byte address 0x4 - core index']
  #allocation1 [shape = 'u32[72,128]{1,0:T(1,128)}', space=vmem, size = 0x9000, scoped, tag = 'internal scratch']
  #allocation2 [shape = 'f32[18,136]{1,0:T(8,128)}', space=vmem, size = 0x6000, scoped, tag = 'scratch operand']
  %s0 = inlined_call_operand.vmem [shape: f32[2,16,128], index: 0, kind: input, shape index: {}]
  %s1 = inlined_call_operand.vmem [shape: f32[1,128], index: 1, kind: input, shape index: {}]
  %s2 = inlined_call_operand.vmem [shape: f32[1,128], index: 2, kind: input, shape index: {}]
  %s3 = inlined_call_operand.vmem [shape: f32[3,136,128], index: 3, kind: input, shape index: {}]
  %s4 = inlined_call_operand.vmem [shape: f32[2,16,128], index: 4, kind: output, shape index: {0}]
  %s5 = inlined_call_operand.vmem [shape: f32[2,1,128], index: 5, kind: output, shape index: {1}]
  %s6 = inlined_call_operand.vmem [shape: f32[2,1,128], index: 6, kind: output, shape index: {2}]
  %7 = xla_tuple %s4, %s5, %s6
  %s8 = sld [smem:[#allocation0]]
  $region65: #{residual_block.4} parent=0
    _
  %s10 = ssub.s32 1, %s8
  %s11 = scalar_select 0, %s10, %s8
  loop: start=0, step=1, limit=4
  $region2: #{residual_block.4} parent=0 // loop_pre_header
    _
  $region3: #{residual_block.4} parent=0 // loop_header
    %s13 = sphi 0, %s17
    %p14 = scmp.ge.s32.totalorder %s13, 4
    %s23 = sphi 0, %s25
    %s26 = sphi 0, %s23
    %s27 = sphi 0, %s26
    %s43 = sphi 0, %s27
    %s47 = sphi 0, %s47
    %s49 = sphi 0, %s47
    %s50 = sphi 0, %s49
    %s64 = sphi 0, %s50
    %s68 = sphi 0, %s68
    %s70 = sphi 0, %s68
    %s71 = sphi 0, %s70
    %s85 = sphi 0, %s71
    %s89 = sphi 0, %s89
    %s91 = sphi 0, %s89
    %s92 = sphi 0, %s91
    %s106 = sphi 0, %s92
    %s112 = sphi 0, %s114
    %s115 = sphi 0, %s112
    %s116 = sphi 0, %s115
    %s132 = sphi 0, %s116
    %s138 = sphi 0, %s140
    %s141 = sphi 0, %s138
    %s142 = sphi 0, %s141
    %s158 = sphi 0, %s142
    %s164 = sphi 0, %s166
    %s167 = sphi 0, %s164
    %s168 = sphi 0, %s167
    %s184 = sphi 0, %s168
  $region4: #{residual_block.4} parent=0 // loop_header_branch
    %16 = sbr.rel (%p14) target = $region8
  $region5: #{residual_block.4} parent=0 // loop_body
    %s18 = ssub.s32 %s13, 1
    %s19 = ssub.s32 %s13, 2
    %s20 = sadd.s32 %s13, 1
    %s21 = ssub.s32 %s13, %s20
    %p22 = scmp.eq.s32.totalorder %s21, 0
    %s24 = sadd.s32 %s23, 1
    %s25 = scalar_select %p22, %s23, %s24
    %p28 = pneg %p22
    %p29 = scmp.eq.s32.totalorder %s13, 1
    %p30 = por %p28, %p29
    %p31 = scmp.ne.s32.totalorder %s23, %s26
    %p32 = scmp.eq.s32.totalorder %s13, 0
    %p33 = por %p31, %p32
    %p34 = scmp.ne.s32.totalorder %s23, %s26
    %p35 = scmp.eq.s32.totalorder %s18, 1
    %p36 = por %p34, %p35
    %p37 = scmp.ne.s32.totalorder %s26, %s27
    %p38 = scmp.eq.s32.totalorder %s18, 0
    %p39 = por %p37, %p38
    %p40 = scmp.ne.s32.totalorder %s26, %s27
    %p41 = scmp.eq.s32.totalorder %s19, 1
    %p42 = por %p40, %p41
    %p44 = scmp.ne.s32.totalorder %s27, %s43
    %p45 = scmp.eq.s32.totalorder %s19, 0
    %p46 = por %p44, %p45
    %s48 = sadd.s32 %s47, 1
    %p51 = scmp.eq.s32.totalorder %s13, 1
    %p52 = scmp.ne.s32.totalorder %s47, %s49
    %p53 = scmp.eq.s32.totalorder %s13, 0
    %p54 = por %p52, %p53
    %p55 = scmp.ne.s32.totalorder %s47, %s49
    %p56 = scmp.eq.s32.totalorder %s18, 1
    %p57 = por %p55, %p56
    %p58 = scmp.ne.s32.totalorder %s49, %s50
    %p59 = scmp.eq.s32.totalorder %s18, 0
    %p60 = por %p58, %p59
    %p61 = scmp.ne.s32.totalorder %s49, %s50
    %p62 = scmp.eq.s32.totalorder %s19, 1
    %p63 = por %p61, %p62
    %p65 = scmp.ne.s32.totalorder %s50, %s64
    %p66 = scmp.eq.s32.totalorder %s19, 0
    %p67 = por %p65, %p66
    %s69 = sadd.s32 %s68, 1
    %p72 = scmp.eq.s32.totalorder %s13, 1
    %p73 = scmp.ne.s32.totalorder %s68, %s70
    %p74 = scmp.eq.s32.totalorder %s13, 0
    %p75 = por %p73, %p74
    %p76 = scmp.ne.s32.totalorder %s68, %s70
    %p77 = scmp.eq.s32.totalorder %s18, 1
    %p78 = por %p76, %p77
    %p79 = scmp.ne.s32.totalorder %s70, %s71
    %p80 = scmp.eq.s32.totalorder %s18, 0
    %p81 = por %p79, %p80
    %p82 = scmp.ne.s32.totalorder %s70, %s71
    %p83 = scmp.eq.s32.totalorder %s19, 1
    %p84 = por %p82, %p83
    %p86 = scmp.ne.s32.totalorder %s71, %s85
    %p87 = scmp.eq.s32.totalorder %s19, 0
    %p88 = por %p86, %p87
    %s90 = sadd.s32 %s89, 1
    %p93 = scmp.eq.s32.totalorder %s13, 1
    %p94 = scmp.ne.s32.totalorder %s89, %s91
    %p95 = scmp.eq.s32.totalorder %s13, 0
    %p96 = por %p94, %p95
    %p97 = scmp.ne.s32.totalorder %s89, %s91
    %p98 = scmp.eq.s32.totalorder %s18, 1
    %p99 = por %p97, %p98
    %p100 = scmp.ne.s32.totalorder %s91, %s92
    %p101 = scmp.eq.s32.totalorder %s18, 0
    %p102 = por %p100, %p101
    %p103 = scmp.ne.s32.totalorder %s91, %s92
    %p104 = scmp.eq.s32.totalorder %s19, 1
    %p105 = por %p103, %p104
    %p107 = scmp.ne.s32.totalorder %s92, %s106
    %p108 = scmp.eq.s32.totalorder %s19, 0
    %p109 = por %p107, %p108
    %s110 = ssub.s32 %s13, %s20
    %p111 = scmp.eq.s32.totalorder %s110, 0
    %s113 = sadd.s32 %s112, 1
    %s114 = scalar_select %p111, %s112, %s113
    %p117 = pneg %p111
    %p118 = scmp.eq.s32.totalorder %s13, 1
    %p119 = por %p117, %p118
    %p120 = scmp.ne.s32.totalorder %s112, %s115
    %p121 = scmp.eq.s32.totalorder %s13, 0
    %p122 = por %p120, %p121
    %p123 = scmp.ne.s32.totalorder %s112, %s115
    %p124 = scmp.eq.s32.totalorder %s18, 1
    %p125 = por %p123, %p124
    %p126 = scmp.ne.s32.totalorder %s115, %s116
    %p127 = scmp.eq.s32.totalorder %s18, 0
    %p128 = por %p126, %p127
    %p129 = scmp.ne.s32.totalorder %s115, %s116
    %p130 = scmp.eq.s32.totalorder %s19, 1
    %p131 = por %p129, %p130
    %p133 = scmp.ne.s32.totalorder %s116, %s132
    %p134 = scmp.eq.s32.totalorder %s19, 0
    %p135 = por %p133, %p134
    %s136 = ssub.s32 %s13, %s20
    %p137 = scmp.eq.s32.totalorder %s136, 0
    %s139 = sadd.s32 %s138, 1
    %s140 = scalar_select %p137, %s138, %s139
    %p143 = pneg %p137
    %p144 = scmp.eq.s32.totalorder %s13, 1
    %p145 = por %p143, %p144
    %p146 = scmp.ne.s32.totalorder %s138, %s141
    %p147 = scmp.eq.s32.totalorder %s13, 0
    %p148 = por %p146, %p147
    %p149 = scmp.ne.s32.totalorder %s138, %s141
    %p150 = scmp.eq.s32.totalorder %s18, 1
    %p151 = por %p149, %p150
    %p152 = scmp.ne.s32.totalorder %s141, %s142
    %p153 = scmp.eq.s32.totalorder %s18, 0
    %p154 = por %p152, %p153
    %p155 = scmp.ne.s32.totalorder %s141, %s142
    %p156 = scmp.eq.s32.totalorder %s19, 1
    %p157 = por %p155, %p156
    %p159 = scmp.ne.s32.totalorder %s142, %s158
    %p160 = scmp.eq.s32.totalorder %s19, 0
    %p161 = por %p159, %p160
    %s162 = ssub.s32 %s13, %s20
    %p163 = scmp.eq.s32.totalorder %s162, 0
    %s165 = sadd.s32 %s164, 1
    %s166 = scalar_select %p163, %s164, %s165
    %p169 = pneg %p163
    %p170 = scmp.eq.s32.totalorder %s13, 1
    %p171 = por %p169, %p170
    %p172 = scmp.ne.s32.totalorder %s164, %s167
    %p173 = scmp.eq.s32.totalorder %s13, 0
    %p174 = por %p172, %p173
    %p175 = scmp.ne.s32.totalorder %s164, %s167
    %p176 = scmp.eq.s32.totalorder %s18, 1
    %p177 = por %p175, %p176
    %p178 = scmp.ne.s32.totalorder %s167, %s168
    %p179 = scmp.eq.s32.totalorder %s18, 0
    %p180 = por %p178, %p179
    %p181 = scmp.ne.s32.totalorder %s167, %s168
    %p182 = scmp.eq.s32.totalorder %s19, 1
    %p183 = por %p181, %p182
    %p185 = scmp.ne.s32.totalorder %s168, %s184
    %p186 = scmp.eq.s32.totalorder %s19, 0
    %p187 = por %p185, %p186
    %p188 = scmp.le.s32.totalorder 1, %s13
    %p189 = scmp.lt.s32.totalorder %s13, 3
    %p190 = pnand %p188, %p189
    %p191 = pneg %p190
    // Predicated region
    $region9: #{residual_block.4} parent=5 // pred_check
      _
    $region10: #{residual_block.4} parent=5 // pred_check_branch
      %193 = sbr.rel (%p190) target = $region12
    $region11: #{residual_block.4} parent=5 // pred_region
      %s194 = ssub.s32 %s13, 1
      // Predicated region
      $region13: #{residual_block.4} parent=11 // pred_check
        %p195 = pneg %p60
      $region14: #{residual_block.4} parent=11 // pred_check_branch
        %197 = sbr.rel (%p195) target = $region16
      $region15: #{residual_block.4} parent=11 // pred_region
        _
      $region16: #{residual_block.4} parent=11 // pred_fallthru
        _
      // Predicated region
      $region17: #{residual_block.4} parent=11 // pred_check
        %p198 = pneg %p81
      $region18: #{residual_block.4} parent=11 // pred_check_branch
        %200 = sbr.rel (%p198) target = $region20
      $region19: #{residual_block.4} parent=11 // pred_region
        _
      $region20: #{residual_block.4} parent=11 // pred_fallthru
        _
      // Predicated region
      $region21: #{residual_block.4} parent=11 // pred_check
        %p201 = pneg %p102
      $region22: #{residual_block.4} parent=11 // pred_check_branch
        %203 = sbr.rel (%p201) target = $region24
      $region23: #{residual_block.4} parent=11 // pred_region
        _
      $region24: #{residual_block.4} parent=11 // pred_fallthru
        _
    $region12: #{residual_block.4} parent=5 // pred_fallthru
      _
    %p204 = scmp.lt.s32.totalorder %s13, 2
    // Predicated region
    $region25: #{residual_block.4} parent=5 // pred_check
      %p205 = pneg %p204
    $region26: #{residual_block.4} parent=5 // pred_check_branch
      %207 = sbr.rel (%p205) target = $region28
    $region27: #{residual_block.4} parent=5 // pred_region
      // Predicated region
      $region29: #{residual_block.4} parent=27 // pred_check
        %p208 = pneg %p33
      $region30: #{residual_block.4} parent=27 // pred_check_branch
        %210 = sbr.rel (%p208) target = $region32
      $region31: #{residual_block.4} parent=27 // pred_region
        %p211 = scmp.lt.s32.totalorder %s13, 1
        %s212 = scalar_select %p211, %s13, 1
        %s213 = smul.addr %s212, 2
        %s214 = smul.addr %s213, 8
        %s215 = scalar_lea.vmem %s0, %s214
      $region32: #{residual_block.4} parent=27 // pred_fallthru
        _
    $region28: #{residual_block.4} parent=5 // pred_fallthru
      _
    %p216 = scmp.le.s32.totalorder 1, %s13
    %p217 = scmp.lt.s32.totalorder %s13, 3
    %p218 = pnand %p216, %p217
    %p219 = pneg %p218
    // Predicated region
    $region33: #{residual_block.4} parent=5 // pred_check
      _
    $region34: #{residual_block.4} parent=5 // pred_check_branch
      %221 = sbr.rel (%p218) target = $region36
    $region35: #{residual_block.4} parent=5 // pred_region
      %s222 = ssub.s32 %s13, 1
      %p223 = scmp.lt.s32.totalorder %s18, 1
      %s224 = scalar_select %p223, %s18, 1
      %s225 = smul.addr %s224, 2
      %s226 = smul.addr %s225, 8
      %s227 = scalar_lea.vmem %s0, %s226
      %p228 = pneg %p39
      %p229 = pneg %p36
      %p230 = pneg %p60
      %p231 = pneg %p57
      %p232 = pneg %p81
      %p233 = pneg %p78
      %p234 = pneg %p102
      %p235 = pneg %p99
      %p236 = pneg %p128
      %p237 = pneg %p125
      %p238 = scmp.lt.s32.totalorder %s18, 1
      %s239 = scalar_select %p238, %s18, 1
      %s240 = smul.addr %s239, 2
      %s241 = smul.addr %s240, 8
      %s242 = scalar_lea.vmem %s4, %s241
      %p243 = pneg %p154
      %p244 = pneg %p151
      %p245 = scmp.lt.s32.totalorder %s18, 1
      %s246 = scalar_select %p245, %s18, 1
      %s247 = scalar_lea.vmem %s5, %s246
      %p248 = pneg %p180
      %p249 = pneg %p177
      %p250 = scmp.lt.s32.totalorder %s18, 1
      %s251 = scalar_select %p250, %s18, 1
      %s252 = scalar_lea.vmem %s6, %s251
      %p253 = scmp.lt.s32.totalorder %s18, 1
      %s254 = scalar_select %p253, %s18, 1
      %s255 = smul.addr %s254, 2
      %s256 = smul.addr %s255, 8
      %s257 = scalar_lea.vmem %s0, %s256
      %p258 = scmp.lt.s32.totalorder %s18, 1
      %s259 = scalar_select %p258, %s18, 1
      %s260 = smul.addr %s259, 2
      %s261 = smul.addr %s260, 8
      %s262 = scalar_lea.vmem %s4, %s261
      %p263 = scmp.lt.s32.totalorder %s18, 1
      %s264 = scalar_select %p263, %s18, 1
      %s265 = scalar_lea.vmem %s5, %s264
      %p266 = scmp.lt.s32.totalorder %s18, 1
      %s267 = scalar_select %p266, %s18, 1
      %s268 = scalar_lea.vmem %s6, %s267
      %v269 = vld [vmem:[%s257] sm:$0xff]
      %v270 = vld [vmem:[%s257 + $0x8] sm:$0xff]
      %v271 = vld [vmem:[%s1] sm:$0x1]
      %v273 = vperm.slane %v271, 0
      %v275 = vmul.f32 %v269, %v273
      %v276 = vmul.f32 %v270, %v273
      %v277 = vld [vmem:[%s2] sm:$0x1]
      %v279 = vperm.slane %v277, 0
      %v281 = vadd.f32 %v275, %v279
      %v282 = vadd.f32 %v276, %v279
      %v283 = vmax.f32 %v281, 0.0
      %v284 = vmax.f32 %v282, 0.0
      %285 = vst [vmem:[#allocation2] sm:$0xff] 0.0
      %vm286 = vcmask 64512
      %287 = vst.msk [vmem:[#allocation2 + $0x8] sm:$0xff] %vm286, 0.0
      %288 = vst [vmem:[#allocation2 + $0x10] sm:$0xff] 0.0
      %289 = vst.msk [vmem:[#allocation2 + $0x18] sm:$0xff] %vm286, 0.0
      %290 = vst [vmem:[#allocation2 + $0x20] sm:$0x3] 0.0
      %vm291 = vcmask 58368
      %292 = vst.msk [vmem:[#allocation2 + $0x28] sm:$0x3] %vm291, 0.0
      %vm295 = vcmask 1040384
      %v296 = vrot.slane %v283, 7
      %v297 = vrot.slane %v284, 7
      %v298 = vsel %vm295, %v296, %v297
      %302 = vst [vmem:[#allocation2] sm:$0xfe] %v296
      %303 = vst [vmem:[#allocation2 + $0x10] sm:$0xff] %v298
      %304 = vst [vmem:[#allocation2 + $0x20] sm:$0x1] %v297
      %v305 = vld [vmem:[#allocation2] sm:$0xff]
      %v306 = vld [vmem:[#allocation2 + $0x8] sm:$0xff]
      %v307 = vld [vmem:[#allocation2 + $0x10] sm:$0xff]
      %v308 = vld [vmem:[#allocation2 + $0x18] sm:$0xff]
      %v309 = vld [vmem:[%s3] sm:$0xff]
      %v310 = vld [vmem:[%s3 + $0x8] sm:$0xff]
      %v311 = vld [vmem:[%s3 + $0x10] sm:$0xff]
      %v312 = vld [vmem:[%s3 + $0x18] sm:$0xff]
      %v313 = vld [vmem:[%s3 + $0x20] sm:$0xff]
      %v314 = vld [vmem:[%s3 + $0x28] sm:$0xff]
      %v315 = vld [vmem:[%s3 + $0x30] sm:$0xff]
      %v316 = vld [vmem:[%s3 + $0x38] sm:$0xff]
      %v317 = vld [vmem:[%s3 + $0x40] sm:$0xff]
      %v318 = vld [vmem:[%s3 + $0x48] sm:$0xff]
      %v319 = vld [vmem:[%s3 + $0x50] sm:$0xff]
      %v320 = vld [vmem:[%s3 + $0x58] sm:$0xff]
      %v321 = vld [vmem:[%s3 + $0x60] sm:$0xff]
      %v322 = vld [vmem:[%s3 + $0x68] sm:$0xff]
      %v323 = vld [vmem:[%s3 + $0x70] sm:$0xff]
      %v324 = vld [vmem:[%s3 + $0x78] sm:$0xff]
      %v325 = vld [vmem:[%s3 + $0x80] sm:$0xff]
      %v326 = vld [vmem:[#allocation2] sm:$0xfe]
      %v327 = vld [vmem:[#allocation2 + $0x8] sm:$0xfe]
      %v328 = vld [vmem:[#allocation2 + $0x20] sm:$0x1]
      %v329 = vld [vmem:[#allocation2 + $0x28] sm:$0x1]
      %s330 = scalar_lea.vmem %s3, 136
      %v331 = vld [vmem:[%s330] sm:$0xff]
      %v332 = vld [vmem:[%s330 + $0x8] sm:$0xff]
      %v333 = vld [vmem:[%s330 + $0x10] sm:$0xff]
      %v334 = vld [vmem:[%s330 + $0x18] sm:$0xff]
      %v335 = vld [vmem:[%s330 + $0x20] sm:$0xff]
      %v336 = vld [vmem:[%s330 + $0x28] sm:$0xff]
      %v337 = vld [vmem:[%s330 + $0x30] sm:$0xff]
      %v338 = vld [vmem:[%s330 + $0x38] sm:$0xff]
      %v339 = vld [vmem:[%s330 + $0x40] sm:$0xff]
      %v340 = vld [vmem:[%s330 + $0x48] sm:$0xff]
      %v341 = vld [vmem:[%s330 + $0x50] sm:$0xff]
      %v342 = vld [vmem:[%s330 + $0x58] sm:$0xff]
      %v343 = vld [vmem:[%s330 + $0x60] sm:$0xff]
      %v344 = vld [vmem:[%s330 + $0x68] sm:$0xff]
      %v345 = vld [vmem:[%s330 + $0x70] sm:$0xff]
      %v346 = vld [vmem:[%s330 + $0x78] sm:$0xff]
      %v347 = vld [vmem:[%s330 + $0x80] sm:$0xff]
      %vm354 = vcmask 1046528
      %v355 = vrot.slane %v326, 1
      %v356 = vrot.slane %v307, 1
      %v357 = vsel %vm354, %v355, %v356
      %v358 = vrot.slane %v327, 1
      %v359 = vrot.slane %v308, 1
      %v360 = vsel %vm354, %v358, %v359
      %v361 = vrot.slane %v328, 1
      %v362 = vsel %vm354, %v356, %v361
      %v363 = vrot.slane %v329, 1
      %v364 = vsel %vm354, %v359, %v363
      %v367 = vsel %vm286, %v360, 0
      %v369 = vsel %vm286, %v364, 0
      %371 = vmatpush.msra.mxu0 %v346
      %372 = vmatpush.msra.mxu0 %v345
      %373 = vmatpush.msra.mxu0 %v344
      %374 = vmatpush.msra.mxu0 %v343
      %375 = vmatpush.msra.mxu0 %v342
      %376 = vmatpush.msra.mxu0 %v341
      %377 = vmatpush.msra.mxu0 %v340
      %378 = vmatpush.msra.mxu0 %v339
      %379 = vmatpush.msra.mxu0 %v338
      %380 = vmatpush.msra.mxu0 %v337
      %381 = vmatpush.msra.mxu0 %v336
      %382 = vmatpush.msra.mxu0 %v335
      %383 = vmatpush.msra.mxu0 %v334
      %384 = vmatpush.msra.mxu0 %v333
      %385 = vmatpush.msra.mxu0 %v332
      %386 = vmatpush.msra.mxu0 %v331
      %387 = vmatmul.f32.gmra.mxu0 %v357
      %v388 = vpop.f32.mrf.mxu0
      %v389 = vadd.f32 0.0, %v388
      %390 = vmatmul.f32.gmra.mxu0 %v362
      %v391 = vpop.f32.mrf.mxu0
      %v392 = vadd.f32 0.0, %v391
      %393 = vdwg.mxu0
      %394 = vmatpush.msra.mxu0 0.0
      %395 = vmatpush.msra.mxu0 0.0
      %396 = vmatpush.msra.mxu0 0.0
      %397 = vmatpush.msra.mxu0 0.0
      %398 = vmatpush.msra.mxu0 0.0
      %399 = vmatpush.msra.mxu0 0.0
      %400 = vmatpush.msra.mxu0 0.0
      %401 = vmatpush.msra.mxu0 0.0
      %402 = vmatpush.msra.mxu0 0.0
      %403 = vmatpush.msra.mxu0 0.0
      %404 = vmatpush.msra.mxu0 0.0
      %405 = vmatpush.msra.mxu0 0.0
      %406 = vmatpush.msra.mxu0 0.0
      %407 = vmatpush.msra.mxu0 0.0
      %408 = vmatpush.msra.mxu0 0.0
      %409 = vmatpush.msra.mxu0 %v347
      %410 = vmatmul.f32.gmra.mxu0 %v367
      %v411 = vpop.f32.mrf.mxu0
      %v412 = vadd.f32 %v389, %v411
      %413 = vmatmul.f32.gmra.mxu0 %v369
      %v414 = vpop.f32.mrf.mxu0
      %v415 = vadd.f32 %v392, %v414
      %416 = vdwg.mxu0
      %v418 = vsel %vm286, %v306, 0
      %v420 = vsel %vm286, %v308, 0
      %422 = vmatpush.msra.mxu0 %v324
      %423 = vmatpush.msra.mxu0 %v323
      %424 = vmatpush.msra.mxu0 %v322
      %425 = vmatpush.msra.mxu0 %v321
      %426 = vmatpush.msra.mxu0 %v320
      %427 = vmatpush.msra.mxu0 %v319
      %428 = vmatpush.msra.mxu0 %v318
      %429 = vmatpush.msra.mxu0 %v317
      %430 = vmatpush.msra.mxu0 %v316
      %431 = vmatpush.msra.mxu0 %v315
      %432 = vmatpush.msra.mxu0 %v314
      %433 = vmatpush.msra.mxu0 %v313
      %434 = vmatpush.msra.mxu0 %v312
      %435 = vmatpush.msra.mxu0 %v311
      %436 = vmatpush.msra.mxu0 %v310
      %437 = vmatpush.msra.mxu0 %v309
      %438 = vmatmul.f32.gmra.mxu0 %v305
      %v439 = vpop.f32.mrf.mxu0
      %v440 = vadd.f32 %v412, %v439
      %441 = vmatmul.f32.gmra.mxu0 %v307
      %v442 = vpop.f32.mrf.mxu0
      %v443 = vadd.f32 %v415, %v442
      %444 = vdwg.mxu0
      %445 = vmatpush.msra.mxu0 0.0
      %446 = vmatpush.msra.mxu0 0.0
      %447 = vmatpush.msra.mxu0 0.0
      %448 = vmatpush.msra.mxu0 0.0
      %449 = vmatpush.msra.mxu0 0.0
      %450 = vmatpush.msra.mxu0 0.0
      %451 = vmatpush.msra.mxu0 0.0
      %452 = vmatpush.msra.mxu0 0.0
      %453 = vmatpush.msra.mxu0 0.0
      %454 = vmatpush.msra.mxu0 0.0
      %455 = vmatpush.msra.mxu0 0.0
      %456 = vmatpush.msra.mxu0 0.0
      %457 = vmatpush.msra.mxu0 0.0
      %458 = vmatpush.msra.mxu0 0.0
      %459 = vmatpush.msra.mxu0 0.0
      %460 = vmatpush.msra.mxu0 %v325
      %461 = vmatmul.f32.gmra.mxu0 %v418
      %v462 = vpop.f32.mrf.mxu0
      %v463 = vadd.f32 %v440, %v462
      %464 = vmatmul.f32.gmra.mxu0 %v420
      %v465 = vpop.f32.mrf.mxu0
      %v466 = vadd.f32 %v443, %v465
      %467 = vdwg.mxu0
      %v468 = vld [vmem:[#allocation2] sm:$0xfc]
      %v469 = vld [vmem:[#allocation2 + $0x8] sm:$0xfc]
      %v470 = vld [vmem:[#allocation2 + $0x20] sm:$0x3]
      %v471 = vld [vmem:[#allocation2 + $0x28] sm:$0x3]
      %s472 = scalar_lea.vmem %s3, 272
      %v473 = vld [vmem:[%s472] sm:$0xff]
      %v474 = vld [vmem:[%s472 + $0x8] sm:$0xff]
      %v475 = vld [vmem:[%s472 + $0x10] sm:$0xff]
      %v476 = vld [vmem:[%s472 + $0x18] sm:$0xff]
      %v477 = vld [vmem:[%s472 + $0x20] sm:$0xff]
      %v478 = vld [vmem:[%s472 + $0x28] sm:$0xff]
      %v479 = vld [vmem:[%s472 + $0x30] sm:$0xff]
      %v480 = vld [vmem:[%s472 + $0x38] sm:$0xff]
      %v481 = vld [vmem:[%s472 + $0x40] sm:$0xff]
      %v482 = vld [vmem:[%s472 + $0x48] sm:$0xff]
      %v483 = vld [vmem:[%s472 + $0x50] sm:$0xff]
      %v484 = vld [vmem:[%s472 + $0x58] sm:$0xff]
      %v485 = vld [vmem:[%s472 + $0x60] sm:$0xff]
      %v486 = vld [vmem:[%s472 + $0x68] sm:$0xff]
      %v487 = vld [vmem:[%s472 + $0x70] sm:$0xff]
      %v488 = vld [vmem:[%s472 + $0x78] sm:$0xff]
      %v489 = vld [vmem:[%s472 + $0x80] sm:$0xff]
      %vm494 = vcmask 1045504
      %v495 = vrot.slane %v468, 2
      %v496 = vrot.slane %v307, 2
      %v497 = vsel %vm494, %v495, %v496
      %v498 = vrot.slane %v469, 2
      %v499 = vrot.slane %v308, 2
      %v500 = vsel %vm494, %v498, %v499
      %v501 = vrot.slane %v470, 2
      %v502 = vsel %vm494, %v496, %v501
      %v503 = vrot.slane %v471, 2
      %v504 = vsel %vm494, %v499, %v503
      %v507 = vsel %vm286, %v500, 0
      %v509 = vsel %vm286, %v504, 0
      %511 = vmatpush.msra.mxu0 %v488
      %512 = vmatpush.msra.mxu0 %v487
      %513 = vmatpush.msra.mxu0 %v486
      %514 = vmatpush.msra.mxu0 %v485
      %515 = vmatpush.msra.mxu0 %v484
      %516 = vmatpush.msra.mxu0 %v483
      %517 = vmatpush.msra.mxu0 %v482
      %518 = vmatpush.msra.mxu0 %v481
      %519 = vmatpush.msra.mxu0 %v480
      %520 = vmatpush.msra.mxu0 %v479
      %521 = vmatpush.msra.mxu0 %v478
      %522 = vmatpush.msra.mxu0 %v477
      %523 = vmatpush.msra.mxu0 %v476
      %524 = vmatpush.msra.mxu0 %v475
      %525 = vmatpush.msra.mxu0 %v474
      %526 = vmatpush.msra.mxu0 %v473
      %527 = vmatmul.f32.gmra.mxu0 %v497
      %v528 = vpop.f32.mrf.mxu0
      %v529 = vadd.f32 0.0, %v528
      %530 = vmatmul.f32.gmra.mxu0 %v502
      %v531 = vpop.f32.mrf.mxu0
      %v532 = vadd.f32 0.0, %v531
      %533 = vdwg.mxu0
      %534 = vmatpush.msra.mxu0 0.0
      %535 = vmatpush.msra.mxu0 0.0
      %536 = vmatpush.msra.mxu0 0.0
      %537 = vmatpush.msra.mxu0 0.0
      %538 = vmatpush.msra.mxu0 0.0
      %539 = vmatpush.msra.mxu0 0.0
      %540 = vmatpush.msra.mxu0 0.0
      %541 = vmatpush.msra.mxu0 0.0
      %542 = vmatpush.msra.mxu0 0.0
      %543 = vmatpush.msra.mxu0 0.0
      %544 = vmatpush.msra.mxu0 0.0
      %545 = vmatpush.msra.mxu0 0.0
      %546 = vmatpush.msra.mxu0 0.0
      %547 = vmatpush.msra.mxu0 0.0
      %548 = vmatpush.msra.mxu0 0.0
      %549 = vmatpush.msra.mxu0 %v489
      %550 = vmatmul.f32.gmra.mxu0 %v507
      %v551 = vpop.f32.mrf.mxu0
      %v552 = vadd.f32 %v529, %v551
      %553 = vmatmul.f32.gmra.mxu0 %v509
      %v554 = vpop.f32.mrf.mxu0
      %v555 = vadd.f32 %v532, %v554
      %556 = vdwg.mxu0
      %v557 = vadd.f32 %v463, %v552
      %v558 = vadd.f32 %v466, %v555
      %559 = vst [vmem:[%s262] sm:$0xff] %v557
      %560 = vst [vmem:[%s262 + $0x8] sm:$0xff] %v558
      %v561 = vadd.f32 %v557, %v558
      %v562 = vrot.slane %v561, 4
      %v563 = vadd.f32 %v561, %v562
      %v564 = vrot.slane %v563, 2
      %v565 = vadd.f32 %v563, %v564
      %v566 = vrot.slane %v565, 1
      %v567 = vadd.f32 %v565, %v566
      %v568 = vrcp.pop 16.0
      %v569 = vmul.f32 16.0, %v568
      %v570 = vsub.f32 1.0, %v569
      %v571 = vmul.f32 %v568, %v570
      %v572 = vadd.f32 %v568, %v571
      %vm573 = vweird.f32 %v568
      %v574 = vsel %vm573, %v568, %v572
      %v575 = vmul.f32 %v567, %v574
      %576 = vst [vmem:[%s265] sm:$0x1] %v575
      %v577 = vsub.f32 %v557, %v575
      %v578 = vsub.f32 %v558, %v575
      %v579 = vmul.f32 %v577, %v577
      %v580 = vmul.f32 %v578, %v578
      %v581 = vadd.f32 %v579, %v580
      %v582 = vrot.slane %v581, 4
      %v583 = vadd.f32 %v581, %v582
      %v584 = vrot.slane %v583, 2
      %v585 = vadd.f32 %v583, %v584
      %v586 = vrot.slane %v585, 1
      %v587 = vadd.f32 %v585, %v586
      %588 = vst [vmem:[%s268] sm:$0x1] %v587
      %p589 = scmp.lt.s32.totalorder %s18, 1
      %s590 = scalar_select %p589, %s18, 1
      %s591 = smul.addr %s590, 2
      %s592 = smul.addr %s591, 8
      %s593 = scalar_lea.vmem %s4, %s592
      %p594 = scmp.lt.s32.totalorder %s18, 1
      %s595 = scalar_select %p594, %s18, 1
      %s596 = scalar_lea.vmem %s5, %s595
      %p597 = scmp.lt.s32.totalorder %s18, 1
      %s598 = scalar_select %p597, %s18, 1
      %s599 = scalar_lea.vmem %s6, %s598
      // Predicated region
      $region37: #{residual_block.4} parent=35 // pred_check
        %p600 = pneg %p125
      $region38: #{residual_block.4} parent=35 // pred_check_branch
        %602 = sbr.rel (%p600) target = $region40
      $region39: #{residual_block.4} parent=35 // pred_region
        _
      $region40: #{residual_block.4} parent=35 // pred_fallthru
        _
      // Predicated region
      $region41: #{residual_block.4} parent=35 // pred_check
        %p603 = pneg %p151
      $region42: #{residual_block.4} parent=35 // pred_check_branch
        %605 = sbr.rel (%p603) target = $region44
      $region43: #{residual_block.4} parent=35 // pred_region
        _
      $region44: #{residual_block.4} parent=35 // pred_fallthru
        _
      // Predicated region
      $region45: #{residual_block.4} parent=35 // pred_check
        %p606 = pneg %p177
      $region46: #{residual_block.4} parent=35 // pred_check_branch
        %608 = sbr.rel (%p606) target = $region48
      $region47: #{residual_block.4} parent=35 // pred_region
        _
      $region48: #{residual_block.4} parent=35 // pred_fallthru
        _
    $region36: #{residual_block.4} parent=5 // pred_fallthru
      _
    %p609 = scmp.le.s32.totalorder 2, %s13
    // Predicated region
    $region49: #{residual_block.4} parent=5 // pred_check
      %p610 = pneg %p609
    $region50: #{residual_block.4} parent=5 // pred_check_branch
      %612 = sbr.rel (%p610) target = $region52
    $region51: #{residual_block.4} parent=5 // pred_region
      %s613 = ssub.s32 %s13, 2
      // Predicated region
      $region53: #{residual_block.4} parent=51 // pred_check
        %p614 = pneg %p131
      $region54: #{residual_block.4} parent=51 // pred_check_branch
        %616 = sbr.rel (%p614) target = $region56
      $region55: #{residual_block.4} parent=51 // pred_region
        %p617 = scmp.lt.s32.totalorder %s19, 1
        %s618 = scalar_select %p617, %s19, 1
        %s619 = smul.addr %s618, 2
        %s620 = smul.addr %s619, 8
        %s621 = scalar_lea.vmem %s4, %s620
      $region56: #{residual_block.4} parent=51 // pred_fallthru
        _
      // Predicated region
      $region57: #{residual_block.4} parent=51 // pred_check
        %p622 = pneg %p157
      $region58: #{residual_block.4} parent=51 // pred_check_branch
        %624 = sbr.rel (%p622) target = $region60
      $region59: #{residual_block.4} parent=51 // pred_region
        %p625 = scmp.lt.s32.totalorder %s19, 1
        %s626 = scalar_select %p625, %s19, 1
        %s627 = scalar_lea.vmem %s5, %s626
      $region60: #{residual_block.4} parent=51 // pred_fallthru
        _
      // Predicated region
      $region61: #{residual_block.4} parent=51 // pred_check
        %p628 = pneg %p183
      $region62: #{residual_block.4} parent=51 // pred_check_branch
        %630 = sbr.rel (%p628) target = $region64
      $region63: #{residual_block.4} parent=51 // pred_region
        %p631 = scmp.lt.s32.totalorder %s19, 1
        %s632 = scalar_select %p631, %s19, 1
        %s633 = scalar_lea.vmem %s6, %s632
      $region64: #{residual_block.4} parent=51 // pred_fallthru
        _
    $region52: #{residual_block.4} parent=5 // pred_fallthru
      _
  $region6: #{residual_block.4} parent=0 // loop_footer
    %s17 = sadd.s32 1, %s13
  $region7: #{residual_block.4} parent=0 // loop_footer_branch
    %12 = sbr.rel target = $region3
  $region8: #{residual_block.4} parent=0 // loop_exit
    _

</llo_original>
